<compile_context>
chip_gen: v5e
topology: v5e:2x2
jax: 0.10.0
libtpu: 0.0.40
codegen_flags: <defaults>
</compile_context>

<pallas_src>
import functools

import jax
import jax.numpy as jnp
from jax.experimental import pallas as pl
from jax.experimental.pallas import tpu as pltpu


def _fused_attention_kernel(x_ref, wqkv_ref, wproj_ref, bias_ref, o_ref, y_ref,
                            *, num_heads, block_b, seq_len):
    """One grid step = `block_b` batch elements, fully fused in VMEM."""
    H = num_heads
    N = seq_len
    C = wproj_ref.shape[0]
    D = C // H

    # ---- (1) Fused QKV projection: one wide (BB*N, C) @ (C, 3C) MXU matmul.
    qkv = jnp.dot(x_ref[...], wqkv_ref[...],
                  preferred_element_type=jnp.float32)
    qkv = qkv.astype(jnp.bfloat16)                    # single down-cast (BB*N, 3C)

    # ---- (2) Re-stack q/k/v head-major once per grid step: (H, BB*N, D).
    #      Leading-batch layout so the attention matmuls are a single batched
    #      dot_general over heads rather than H isolated, drain-bound matmuls.
    q_all = jnp.stack([qkv[:, h * D:(h + 1) * D] for h in range(H)], axis=0)
    k_all = jnp.stack([qkv[:, C + h * D:C + (h + 1) * D] for h in range(H)], axis=0)
    v_all = jnp.stack([qkv[:, 2 * C + h * D:2 * C + (h + 1) * D] for h in range(H)], axis=0)

    # ---- (3) Attention per batch element; heads batched on the MXU.
    # TODO(synk): for long-sequence / high-res ViT, tile query rows with an
    # online-softmax accumulator instead of materializing (H, N, N) scores.
    for b in range(block_b):                          # static unroll; block_b is small
        r0, r1 = b * N, (b + 1) * N
        q = q_all[:, r0:r1, :]                        # (H, N, D) sublane slices (cheap)
        k = k_all[:, r0:r1, :]
        v = v_all[:, r0:r1, :]

        # Scores; softmax scale already folded into the q weight columns.
        s = jnp.einsum('hnd,hmd->hnm', q, k,
                       preferred_element_type=jnp.float32)       # (H, N, N) f32
        s = s - jnp.max(s, axis=-1, keepdims=True)
        p = jnp.exp(s)                                           # f32 elementwise (v5e-safe)
        p = p * pl.reciprocal(jnp.sum(p, axis=-1, keepdims=True), approx=True)
        # attn_drop has p=0.0 -> identity

        y_hnd = jnp.einsum('hnm,hmd->hnd', p.astype(jnp.bfloat16), v,
                           preferred_element_type=jnp.float32)   # (H, N, D)
        y_hnd = y_hnd.astype(jnp.bfloat16)

        # Scatter heads into the lane-dense merged scratch (replaces the old
        # lane-axis concatenate and bounds per-head live ranges).
        for h in range(H):
            y_ref[r0:r1, h * D:(h + 1) * D] = y_hnd[h]

    # ---- (4) Output projection over the whole (BB*N, C) slab + bias.
    out = jnp.dot(y_ref[...], wproj_ref[...],
                  preferred_element_type=jnp.float32)
    out = out + bias_ref[...]
    # proj_drop has p=0.0 -> identity
    o_ref[...] = out.astype(o_ref.dtype)


def _vmem_limit_bytes():
    """Per-generation VMEM budget: ~75% of physical capacity (v5e/v6e: 128 MiB,
    v7x: 64 MiB), clamped to a sane range; safe fallback if the query fails."""
    try:
        cap = pltpu.get_tpu_info().vmem_capacity_bytes
        return int(max(32 * 1024 * 1024, min(int(cap * 0.75), 112 * 1024 * 1024)))
    except Exception:
        return 48 * 1024 * 1024


def prepare_weights(qkv_w, proj_w, proj_b, num_heads):
    """One-time weight prep (hoisted out of the per-call path).

    qkv_w: (3C, C) PyTorch (out, in); proj_w: (C, C); proj_b: (C,).
    Returns bf16 (C, 3C) qkv weight with the softmax scale folded into the q
    columns, bf16 (C, C) transposed proj weight, and (1, C) f32 bias.
    """
    C = proj_w.shape[0]
    assert C % num_heads == 0, "num_heads must divide the embedding dim"
    D = C // num_heads
    scale = D ** (-0.5)
    wq = qkv_w[:C].T * scale                  # fold softmax scale into q projection
    wk = qkv_w[C:2 * C].T
    wv = qkv_w[2 * C:].T
    wqkv = jnp.concatenate([wq, wk, wv], axis=1).astype(jnp.bfloat16)    # (C, 3C)
    wproj = proj_w.T.astype(jnp.bfloat16)                                # (C, C)
    bproj = proj_b.reshape(1, C).astype(jnp.float32)                     # (1, C)
    return wqkv, wproj, bproj


def attention_forward(x, wqkv, wproj, bproj, num_heads, *, block_b=None):
    """x: (B, N, C) (bf16 preferred); wqkv: (C, 3C) bf16; wproj: (C, C) bf16;
    bproj: (1, C) f32.  Returns (B, N, C) in x.dtype."""
    B, N, C = x.shape
    if block_b is None:
        block_b = 1
        for cand in (8, 4, 2, 1):             # largest divisor of B that is <= 8
            if B % cand == 0:
                block_b = cand
                break
    assert B % block_b == 0, "block_b must divide the batch size"

    x2 = x.reshape(B * N, C)                  # lane/sublane-dense 2-D activation slab
    bbn = block_b * N

    out2 = pl.pallas_call(
        functools.partial(_fused_attention_kernel, num_heads=num_heads,
                          block_b=block_b, seq_len=N),
        out_shape=jax.ShapeDtypeStruct((B * N, C), x.dtype),
        grid=(B // block_b,),
        in_specs=[
            pl.BlockSpec((bbn, C), lambda i: (i, 0)),        # activations
            pl.BlockSpec((C, 3 * C), lambda i: (0, 0)),      # Wqkv (grid-invariant)
            pl.BlockSpec((C, C), lambda i: (0, 0)),          # Wproj (grid-invariant)
            pl.BlockSpec((1, C), lambda i: (0, 0)),          # bias
        ],
        out_specs=pl.BlockSpec((bbn, C), lambda i: (i, 0)),
        scratch_shapes=[pltpu.VMEM((bbn, C), jnp.bfloat16)],  # merged-head buffer
        compiler_params=pltpu.CompilerParams(
            dimension_semantics=("parallel",),   # batch blocks shard across TCs (v7x)
            vmem_limit_bytes=_vmem_limit_bytes(),
        ),
    )(x2, wqkv, wproj, bproj)
    return out2.reshape(B, N, C)


def _reference(x, qkv_w, proj_w, proj_b, num_heads):
    """Pure-JAX (f32) mirror of the PyTorch forward, for correctness checking."""
    B, N, C = x.shape
    H = num_heads
    D = C // H
    qkv = x @ qkv_w.T                                          # (B, N, 3C)
    qkv = qkv.reshape(B, N, 3, H, D).transpose(2, 0, 3, 1, 4)  # (3, B, H, N, D)
    q, k, v = qkv[0], qkv[1], qkv[2]
    attn = jnp.einsum("bhnd,bhmd->bhnm", q, k) * (D ** -0.5)
    attn = jax.nn.softmax(attn, axis=-1)
    y = jnp.einsum("bhnm,bhmd->bhnd", attn, v)
    y = y.transpose(0, 2, 1, 3).reshape(B, N, C)
    return y @ proj_w.T + proj_b


if __name__ == "__main__":
    # Small deterministic config: dim=64, num_heads=8 (head_dim=8), B=4, N=16.
    B, N, C, H = 4, 16, 64, 8
    key = jax.random.PRNGKey(0)
    kx, kq, kp, kb = jax.random.split(key, 4)

    x = jax.random.normal(kx, (B, N, C), dtype=jnp.float32)
    qkv_w = jax.random.normal(kq, (3 * C, C), dtype=jnp.float32) * 0.05  # nn.Linear(dim, 3*dim, bias=False)
    proj_w = jax.random.normal(kp, (C, C), dtype=jnp.float32) * 0.05     # nn.Linear(dim, dim)
    proj_b = jax.random.normal(kb, (C,), dtype=jnp.float32) * 0.05

    # One-time weight prep (layout + bf16 + folded scale), hoisted out of forward.
    wqkv, wproj, bproj = prepare_weights(qkv_w, proj_w, proj_b, num_heads=H)

    # Activations in bf16 (halved DMA); block_b=2 -> grid of 2 steps x 2 elements.
    out = attention_forward(x.astype(jnp.bfloat16), wqkv, wproj, bproj,
                            num_heads=H, block_b=2)
    out = jax.block_until_ready(out)

    ref = _reference(x, qkv_w, proj_w, proj_b, num_heads=H)
    assert out.shape == (B, N, C)
    # bf16 activations/weights + bf16 MXU operands (f32 accumulation) + approx
    # reciprocal -> loosened tolerance vs the f32 reference.
    out_f32 = out.astype(jnp.float32)
    err = jnp.max(jnp.abs(out_f32 - ref))
    assert jnp.allclose(out_f32, ref, atol=2e-2, rtol=2e-2), \
        f"mismatch vs reference (max abs err {err})"

    print("KERNEL_OK")
</pallas_src>

<mosaic_0001>
module attributes {stable_mosaic.version = 11 : i64} {
  func.func @_fused_attention_kernel(%arg0: i32, %arg1: memref<32x64xbf16, #tpu.memory_space<vmem>>, %arg2: memref<64x192xbf16, #tpu.memory_space<vmem>>, %arg3: memref<64x64xbf16, #tpu.memory_space<vmem>>, %arg4: memref<1x64xf32, #tpu.memory_space<vmem>>, %arg5: memref<32x64xbf16, #tpu.memory_space<vmem>>, %arg6: memref<32x64xbf16, #tpu.memory_space<vmem>>) attributes {dimension_semantics = [#tpu.dimension_semantics<parallel>], iteration_bounds = array<i64: 2>, scalar_prefetch = 0 : i64, scratch_operands = 1 : i64, tpu.core_type = #tpu.core_type<tc>, window_params = [{transform_indices = @transform_0, window_bounds = array<i64: 32, 64>}, {pipeline_mode = #tpu.pipeline_mode<synchronous>, transform_indices = @transform_1, window_bounds = array<i64: 64, 192>}, {pipeline_mode = #tpu.pipeline_mode<synchronous>, transform_indices = @transform_2, window_bounds = array<i64: 64, 64>}, {pipeline_mode = #tpu.pipeline_mode<synchronous>, transform_indices = @transform_3, window_bounds = array<i64: 1, 64>}, {transform_indices = @transform_4, window_bounds = array<i64: 32, 64>}]} {
    %c0 = arith.constant 0 : index
    %c0_0 = arith.constant 0 : index
    %0 = vector.load %arg1[%c0, %c0_0] : memref<32x64xbf16, #tpu.memory_space<vmem>>, vector<32x64xbf16>
    %c0_1 = arith.constant 0 : index
    %c0_2 = arith.constant 0 : index
    %1 = vector.load %arg2[%c0_1, %c0_2] : memref<64x192xbf16, #tpu.memory_space<vmem>>, vector<64x192xbf16>
    %cst = arith.constant dense<0.000000e+00> : vector<32x192xf32>
    %2 = tpu.matmul %0, %1, %cst {dimension_numbers = #tpu.dot_dimension_numbers<[1], [0], [0], [1], [0, 0, 1, 1], [], []>} : vector<32x64xbf16>, vector<64x192xbf16>, vector<32x192xf32> -> vector<32x192xf32>
    %3 = arith.truncf %2 : vector<32x192xf32> to vector<32x192xbf16>
    %4 = vector.extract_strided_slice %3 {offsets = [0, 0], sizes = [32, 8], strides = [1, 1]} : vector<32x192xbf16> to vector<32x8xbf16>
    %5 = vector.extract_strided_slice %3 {offsets = [0, 8], sizes = [32, 8], strides = [1, 1]} : vector<32x192xbf16> to vector<32x8xbf16>
    %6 = vector.extract_strided_slice %3 {offsets = [0, 16], sizes = [32, 8], strides = [1, 1]} : vector<32x192xbf16> to vector<32x8xbf16>
    %7 = vector.extract_strided_slice %3 {offsets = [0, 24], sizes = [32, 8], strides = [1, 1]} : vector<32x192xbf16> to vector<32x8xbf16>
    %8 = vector.extract_strided_slice %3 {offsets = [0, 32], sizes = [32, 8], strides = [1, 1]} : vector<32x192xbf16> to vector<32x8xbf16>
    %9 = vector.extract_strided_slice %3 {offsets = [0, 40], sizes = [32, 8], strides = [1, 1]} : vector<32x192xbf16> to vector<32x8xbf16>
    %10 = vector.extract_strided_slice %3 {offsets = [0, 48], sizes = [32, 8], strides = [1, 1]} : vector<32x192xbf16> to vector<32x8xbf16>
    %11 = vector.extract_strided_slice %3 {offsets = [0, 56], sizes = [32, 8], strides = [1, 1]} : vector<32x192xbf16> to vector<32x8xbf16>
    %12 = vector.shape_cast %4 : vector<32x8xbf16> to vector<1x32x8xbf16>
    %13 = vector.shape_cast %5 : vector<32x8xbf16> to vector<1x32x8xbf16>
    %14 = vector.shape_cast %6 : vector<32x8xbf16> to vector<1x32x8xbf16>
    %15 = vector.shape_cast %7 : vector<32x8xbf16> to vector<1x32x8xbf16>
    %16 = vector.shape_cast %8 : vector<32x8xbf16> to vector<1x32x8xbf16>
    %17 = vector.shape_cast %9 : vector<32x8xbf16> to vector<1x32x8xbf16>
    %18 = vector.shape_cast %10 : vector<32x8xbf16> to vector<1x32x8xbf16>
    %19 = vector.shape_cast %11 : vector<32x8xbf16> to vector<1x32x8xbf16>
    %20 = tpu.concatenate %12, %13, %14, %15, %16, %17, %18, %19 in 0 : vector<1x32x8xbf16>, vector<1x32x8xbf16>, vector<1x32x8xbf16>, vector<1x32x8xbf16>, vector<1x32x8xbf16>, vector<1x32x8xbf16>, vector<1x32x8xbf16>, vector<1x32x8xbf16> -> vector<8x32x8xbf16>
    %21 = vector.extract_strided_slice %3 {offsets = [0, 64], sizes = [32, 8], strides = [1, 1]} : vector<32x192xbf16> to vector<32x8xbf16>
    %22 = vector.extract_strided_slice %3 {offsets = [0, 72], sizes = [32, 8], strides = [1, 1]} : vector<32x192xbf16> to vector<32x8xbf16>
    %23 = vector.extract_strided_slice %3 {offsets = [0, 80], sizes = [32, 8], strides = [1, 1]} : vector<32x192xbf16> to vector<32x8xbf16>
    %24 = vector.extract_strided_slice %3 {offsets = [0, 88], sizes = [32, 8], strides = [1, 1]} : vector<32x192xbf16> to vector<32x8xbf16>
    %25 = vector.extract_strided_slice %3 {offsets = [0, 96], sizes = [32, 8], strides = [1, 1]} : vector<32x192xbf16> to vector<32x8xbf16>
    %26 = vector.extract_strided_slice %3 {offsets = [0, 104], sizes = [32, 8], strides = [1, 1]} : vector<32x192xbf16> to vector<32x8xbf16>
    %27 = vector.extract_strided_slice %3 {offsets = [0, 112], sizes = [32, 8], strides = [1, 1]} : vector<32x192xbf16> to vector<32x8xbf16>
    %28 = vector.extract_strided_slice %3 {offsets = [0, 120], sizes = [32, 8], strides = [1, 1]} : vector<32x192xbf16> to vector<32x8xbf16>
    %29 = vector.shape_cast %21 : vector<32x8xbf16> to vector<1x32x8xbf16>
    %30 = vector.shape_cast %22 : vector<32x8xbf16> to vector<1x32x8xbf16>
    %31 = vector.shape_cast %23 : vector<32x8xbf16> to vector<1x32x8xbf16>
    %32 = vector.shape_cast %24 : vector<32x8xbf16> to vector<1x32x8xbf16>
    %33 = vector.shape_cast %25 : vector<32x8xbf16> to vector<1x32x8xbf16>
    %34 = vector.shape_cast %26 : vector<32x8xbf16> to vector<1x32x8xbf16>
    %35 = vector.shape_cast %27 : vector<32x8xbf16> to vector<1x32x8xbf16>
    %36 = vector.shape_cast %28 : vector<32x8xbf16> to vector<1x32x8xbf16>
    %37 = tpu.concatenate %29, %30, %31, %32, %33, %34, %35, %36 in 0 : vector<1x32x8xbf16>, vector<1x32x8xbf16>, vector<1x32x8xbf16>, vector<1x32x8xbf16>, vector<1x32x8xbf16>, vector<1x32x8xbf16>, vector<1x32x8xbf16>, vector<1x32x8xbf16> -> vector<8x32x8xbf16>
    %38 = vector.extract_strided_slice %3 {offsets = [0, 128], sizes = [32, 8], strides = [1, 1]} : vector<32x192xbf16> to vector<32x8xbf16>
    %39 = vector.extract_strided_slice %3 {offsets = [0, 136], sizes = [32, 8], strides = [1, 1]} : vector<32x192xbf16> to vector<32x8xbf16>
    %40 = vector.extract_strided_slice %3 {offsets = [0, 144], sizes = [32, 8], strides = [1, 1]} : vector<32x192xbf16> to vector<32x8xbf16>
    %41 = vector.extract_strided_slice %3 {offsets = [0, 152], sizes = [32, 8], strides = [1, 1]} : vector<32x192xbf16> to vector<32x8xbf16>
    %42 = vector.extract_strided_slice %3 {offsets = [0, 160], sizes = [32, 8], strides = [1, 1]} : vector<32x192xbf16> to vector<32x8xbf16>
    %43 = vector.extract_strided_slice %3 {offsets = [0, 168], sizes = [32, 8], strides = [1, 1]} : vector<32x192xbf16> to vector<32x8xbf16>
    %44 = vector.extract_strided_slice %3 {offsets = [0, 176], sizes = [32, 8], strides = [1, 1]} : vector<32x192xbf16> to vector<32x8xbf16>
    %45 = vector.extract_strided_slice %3 {offsets = [0, 184], sizes = [32, 8], strides = [1, 1]} : vector<32x192xbf16> to vector<32x8xbf16>
    %46 = vector.shape_cast %38 : vector<32x8xbf16> to vector<1x32x8xbf16>
    %47 = vector.shape_cast %39 : vector<32x8xbf16> to vector<1x32x8xbf16>
    %48 = vector.shape_cast %40 : vector<32x8xbf16> to vector<1x32x8xbf16>
    %49 = vector.shape_cast %41 : vector<32x8xbf16> to vector<1x32x8xbf16>
    %50 = vector.shape_cast %42 : vector<32x8xbf16> to vector<1x32x8xbf16>
    %51 = vector.shape_cast %43 : vector<32x8xbf16> to vector<1x32x8xbf16>
    %52 = vector.shape_cast %44 : vector<32x8xbf16> to vector<1x32x8xbf16>
    %53 = vector.shape_cast %45 : vector<32x8xbf16> to vector<1x32x8xbf16>
    %54 = tpu.concatenate %46, %47, %48, %49, %50, %51, %52, %53 in 0 : vector<1x32x8xbf16>, vector<1x32x8xbf16>, vector<1x32x8xbf16>, vector<1x32x8xbf16>, vector<1x32x8xbf16>, vector<1x32x8xbf16>, vector<1x32x8xbf16>, vector<1x32x8xbf16> -> vector<8x32x8xbf16>
    %55 = vector.extract_strided_slice %20 {offsets = [0, 0, 0], sizes = [8, 16, 8], strides = [1, 1, 1]} : vector<8x32x8xbf16> to vector<8x16x8xbf16>
    %56 = vector.extract_strided_slice %37 {offsets = [0, 0, 0], sizes = [8, 16, 8], strides = [1, 1, 1]} : vector<8x32x8xbf16> to vector<8x16x8xbf16>
    %57 = vector.extract_strided_slice %54 {offsets = [0, 0, 0], sizes = [8, 16, 8], strides = [1, 1, 1]} : vector<8x32x8xbf16> to vector<8x16x8xbf16>
    "tpu.trace_start"() <{level = 10 : i32, message = "hnd,hmd->hnm"}> : () -> ()
    %cst_3 = arith.constant dense<0.000000e+00> : vector<8x16x16xf32>
    %58 = tpu.matmul %55, %56, %cst_3 {dimension_numbers = #tpu.dot_dimension_numbers<[2], [2], [1], [1], [0, 0, 0, 1, 1, 1], [0], [0]>} : vector<8x16x8xbf16>, vector<8x16x8xbf16>, vector<8x16x16xf32> -> vector<8x16x16xf32>
    "tpu.trace_stop"() : () -> ()
    %cst_4 = arith.constant dense<0xFF800000> : vector<8x16xf32>
    %59 = vector.multi_reduction <maximumf>, %58, %cst_4 [2] : vector<8x16x16xf32> to vector<8x16xf32>
    %60 = vector.shape_cast %59 : vector<8x16xf32> to vector<8x16x1xf32>
    %61 = vector.broadcast %60 : vector<8x16x1xf32> to vector<8x16x16xf32>
    %62 = arith.subf %58, %61 : vector<8x16x16xf32>
    %63 = math.exp %62 : vector<8x16x16xf32>
    %cst_5 = arith.constant dense<0.000000e+00> : vector<8x16xf32>
    %64 = vector.multi_reduction <add>, %63, %cst_5 [2] : vector<8x16x16xf32> to vector<8x16xf32>
    %65 = vector.shape_cast %64 : vector<8x16xf32> to vector<8x16x1xf32>
    %66 = tpu.reciprocal %65 {approx = true} : vector<8x16x1xf32> -> vector<8x16x1xf32>
    %67 = vector.broadcast %66 : vector<8x16x1xf32> to vector<8x16x16xf32>
    %68 = arith.mulf %63, %67 : vector<8x16x16xf32>
    %69 = arith.truncf %68 : vector<8x16x16xf32> to vector<8x16x16xbf16>
    "tpu.trace_start"() <{level = 10 : i32, message = "hnm,hmd->hnd"}> : () -> ()
    %cst_6 = arith.constant dense<0.000000e+00> : vector<8x16x8xf32>
    %70 = tpu.matmul %69, %57, %cst_6 {dimension_numbers = #tpu.dot_dimension_numbers<[2], [1], [1], [2], [0, 0, 0, 1, 1, 2], [0], [0]>} : vector<8x16x16xbf16>, vector<8x16x8xbf16>, vector<8x16x8xf32> -> vector<8x16x8xf32>
    "tpu.trace_stop"() : () -> ()
    %71 = arith.truncf %70 : vector<8x16x8xf32> to vector<8x16x8xbf16>
    %72 = vector.extract_strided_slice %71 {offsets = [0, 0, 0], sizes = [1, 16, 8], strides = [1, 1, 1]} : vector<8x16x8xbf16> to vector<1x16x8xbf16>
    %73 = vector.shape_cast %72 : vector<1x16x8xbf16> to vector<16x8xbf16>
    %c0_7 = arith.constant 0 : index
    %c0_8 = arith.constant 0 : index
    %74 = vector.load %arg6[%c0_7, %c0_8] : memref<32x64xbf16, #tpu.memory_space<vmem>>, vector<16x8xbf16>
    tpu.vector_store %arg6[%c0_7, %c0_8], %73 {strides = array<i32>} : memref<32x64xbf16, #tpu.memory_space<vmem>>, vector<16x8xbf16>,
    %75 = vector.extract_strided_slice %71 {offsets = [1, 0, 0], sizes = [1, 16, 8], strides = [1, 1, 1]} : vector<8x16x8xbf16> to vector<1x16x8xbf16>
    %76 = vector.shape_cast %75 : vector<1x16x8xbf16> to vector<16x8xbf16>
    %c0_9 = arith.constant 0 : index
    %c8 = arith.constant 8 : index
    %77 = vector.load %arg6[%c0_9, %c8] : memref<32x64xbf16, #tpu.memory_space<vmem>>, vector<16x8xbf16>
    tpu.vector_store %arg6[%c0_9, %c8], %76 {strides = array<i32>} : memref<32x64xbf16, #tpu.memory_space<vmem>>, vector<16x8xbf16>,
    %78 = vector.extract_strided_slice %71 {offsets = [2, 0, 0], sizes = [1, 16, 8], strides = [1, 1, 1]} : vector<8x16x8xbf16> to vector<1x16x8xbf16>
    %79 = vector.shape_cast %78 : vector<1x16x8xbf16> to vector<16x8xbf16>
    %c0_10 = arith.constant 0 : index
    %c16 = arith.constant 16 : index
    %80 = vector.load %arg6[%c0_10, %c16] : memref<32x64xbf16, #tpu.memory_space<vmem>>, vector<16x8xbf16>
    tpu.vector_store %arg6[%c0_10, %c16], %79 {strides = array<i32>} : memref<32x64xbf16, #tpu.memory_space<vmem>>, vector<16x8xbf16>,
    %81 = vector.extract_strided_slice %71 {offsets = [3, 0, 0], sizes = [1, 16, 8], strides = [1, 1, 1]} : vector<8x16x8xbf16> to vector<1x16x8xbf16>
    %82 = vector.shape_cast %81 : vector<1x16x8xbf16> to vector<16x8xbf16>
    %c0_11 = arith.constant 0 : index
    %c24 = arith.constant 24 : index
    %83 = vector.load %arg6[%c0_11, %c24] : memref<32x64xbf16, #tpu.memory_space<vmem>>, vector<16x8xbf16>
    tpu.vector_store %arg6[%c0_11, %c24], %82 {strides = array<i32>} : memref<32x64xbf16, #tpu.memory_space<vmem>>, vector<16x8xbf16>,
    %84 = vector.extract_strided_slice %71 {offsets = [4, 0, 0], sizes = [1, 16, 8], strides = [1, 1, 1]} : vector<8x16x8xbf16> to vector<1x16x8xbf16>
    %85 = vector.shape_cast %84 : vector<1x16x8xbf16> to vector<16x8xbf16>
    %c0_12 = arith.constant 0 : index
    %c32 = arith.constant 32 : index
    %86 = vector.load %arg6[%c0_12, %c32] : memref<32x64xbf16, #tpu.memory_space<vmem>>, vector<16x8xbf16>
    tpu.vector_store %arg6[%c0_12, %c32], %85 {strides = array<i32>} : memref<32x64xbf16, #tpu.memory_space<vmem>>, vector<16x8xbf16>,
    %87 = vector.extract_strided_slice %71 {offsets = [5, 0, 0], sizes = [1, 16, 8], strides = [1, 1, 1]} : vector<8x16x8xbf16> to vector<1x16x8xbf16>
    %88 = vector.shape_cast %87 : vector<1x16x8xbf16> to vector<16x8xbf16>
    %c0_13 = arith.constant 0 : index
    %c40 = arith.constant 40 : index
    %89 = vector.load %arg6[%c0_13, %c40] : memref<32x64xbf16, #tpu.memory_space<vmem>>, vector<16x8xbf16>
    tpu.vector_store %arg6[%c0_13, %c40], %88 {strides = array<i32>} : memref<32x64xbf16, #tpu.memory_space<vmem>>, vector<16x8xbf16>,
    %90 = vector.extract_strided_slice %71 {offsets = [6, 0, 0], sizes = [1, 16, 8], strides = [1, 1, 1]} : vector<8x16x8xbf16> to vector<1x16x8xbf16>
    %91 = vector.shape_cast %90 : vector<1x16x8xbf16> to vector<16x8xbf16>
    %c0_14 = arith.constant 0 : index
    %c48 = arith.constant 48 : index
    %92 = vector.load %arg6[%c0_14, %c48] : memref<32x64xbf16, #tpu.memory_space<vmem>>, vector<16x8xbf16>
    tpu.vector_store %arg6[%c0_14, %c48], %91 {strides = array<i32>} : memref<32x64xbf16, #tpu.memory_space<vmem>>, vector<16x8xbf16>,
    %93 = vector.extract_strided_slice %71 {offsets = [7, 0, 0], sizes = [1, 16, 8], strides = [1, 1, 1]} : vector<8x16x8xbf16> to vector<1x16x8xbf16>
    %94 = vector.shape_cast %93 : vector<1x16x8xbf16> to vector<16x8xbf16>
    %c0_15 = arith.constant 0 : index
    %c56 = arith.constant 56 : index
    %95 = vector.load %arg6[%c0_15, %c56] : memref<32x64xbf16, #tpu.memory_space<vmem>>, vector<16x8xbf16>
    tpu.vector_store %arg6[%c0_15, %c56], %94 {strides = array<i32>} : memref<32x64xbf16, #tpu.memory_space<vmem>>, vector<16x8xbf16>,
    %96 = vector.extract_strided_slice %20 {offsets = [0, 16, 0], sizes = [8, 16, 8], strides = [1, 1, 1]} : vector<8x32x8xbf16> to vector<8x16x8xbf16>
    %97 = vector.extract_strided_slice %37 {offsets = [0, 16, 0], sizes = [8, 16, 8], strides = [1, 1, 1]} : vector<8x32x8xbf16> to vector<8x16x8xbf16>
    %98 = vector.extract_strided_slice %54 {offsets = [0, 16, 0], sizes = [8, 16, 8], strides = [1, 1, 1]} : vector<8x32x8xbf16> to vector<8x16x8xbf16>
    "tpu.trace_start"() <{level = 10 : i32, message = "hnd,hmd->hnm"}> : () -> ()
    %cst_16 = arith.constant dense<0.000000e+00> : vector<8x16x16xf32>
    %99 = tpu.matmul %96, %97, %cst_16 {dimension_numbers = #tpu.dot_dimension_numbers<[2], [2], [1], [1], [0, 0, 0, 1, 1, 1], [0], [0]>} : vector<8x16x8xbf16>, vector<8x16x8xbf16>, vector<8x16x16xf32> -> vector<8x16x16xf32>
    "tpu.trace_stop"() : () -> ()
    %cst_17 = arith.constant dense<0xFF800000> : vector<8x16xf32>
    %100 = vector.multi_reduction <maximumf>, %99, %cst_17 [2] : vector<8x16x16xf32> to vector<8x16xf32>
    %101 = vector.shape_cast %100 : vector<8x16xf32> to vector<8x16x1xf32>
    %102 = vector.broadcast %101 : vector<8x16x1xf32> to vector<8x16x16xf32>
    %103 = arith.subf %99, %102 : vector<8x16x16xf32>
    %104 = math.exp %103 : vector<8x16x16xf32>
    %cst_18 = arith.constant dense<0.000000e+00> : vector<8x16xf32>
    %105 = vector.multi_reduction <add>, %104, %cst_18 [2] : vector<8x16x16xf32> to vector<8x16xf32>
    %106 = vector.shape_cast %105 : vector<8x16xf32> to vector<8x16x1xf32>
    %107 = tpu.reciprocal %106 {approx = true} : vector<8x16x1xf32> -> vector<8x16x1xf32>
    %108 = vector.broadcast %107 : vector<8x16x1xf32> to vector<8x16x16xf32>
    %109 = arith.mulf %104, %108 : vector<8x16x16xf32>
    %110 = arith.truncf %109 : vector<8x16x16xf32> to vector<8x16x16xbf16>
    "tpu.trace_start"() <{level = 10 : i32, message = "hnm,hmd->hnd"}> : () -> ()
    %cst_19 = arith.constant dense<0.000000e+00> : vector<8x16x8xf32>
    %111 = tpu.matmul %110, %98, %cst_19 {dimension_numbers = #tpu.dot_dimension_numbers<[2], [1], [1], [2], [0, 0, 0, 1, 1, 2], [0], [0]>} : vector<8x16x16xbf16>, vector<8x16x8xbf16>, vector<8x16x8xf32> -> vector<8x16x8xf32>
    "tpu.trace_stop"() : () -> ()
    %112 = arith.truncf %111 : vector<8x16x8xf32> to vector<8x16x8xbf16>
    %113 = vector.extract_strided_slice %112 {offsets = [0, 0, 0], sizes = [1, 16, 8], strides = [1, 1, 1]} : vector<8x16x8xbf16> to vector<1x16x8xbf16>
    %114 = vector.shape_cast %113 : vector<1x16x8xbf16> to vector<16x8xbf16>
    %c16_20 = arith.constant 16 : index
    %c0_21 = arith.constant 0 : index
    %115 = vector.load %arg6[%c16_20, %c0_21] : memref<32x64xbf16, #tpu.memory_space<vmem>>, vector<16x8xbf16>
    tpu.vector_store %arg6[%c16_20, %c0_21], %114 {strides = array<i32>} : memref<32x64xbf16, #tpu.memory_space<vmem>>, vector<16x8xbf16>,
    %116 = vector.extract_strided_slice %112 {offsets = [1, 0, 0], sizes = [1, 16, 8], strides = [1, 1, 1]} : vector<8x16x8xbf16> to vector<1x16x8xbf16>
    %117 = vector.shape_cast %116 : vector<1x16x8xbf16> to vector<16x8xbf16>
    %c16_22 = arith.constant 16 : index
    %c8_23 = arith.constant 8 : index
    %118 = vector.load %arg6[%c16_22, %c8_23] : memref<32x64xbf16, #tpu.memory_space<vmem>>, vector<16x8xbf16>
    tpu.vector_store %arg6[%c16_22, %c8_23], %117 {strides = array<i32>} : memref<32x64xbf16, #tpu.memory_space<vmem>>, vector<16x8xbf16>,
    %119 = vector.extract_strided_slice %112 {offsets = [2, 0, 0], sizes = [1, 16, 8], strides = [1, 1, 1]} : vector<8x16x8xbf16> to vector<1x16x8xbf16>
    %120 = vector.shape_cast %119 : vector<1x16x8xbf16> to vector<16x8xbf16>
    %c16_24 = arith.constant 16 : index
    %c16_25 = arith.constant 16 : index
    %121 = vector.load %arg6[%c16_24, %c16_25] : memref<32x64xbf16, #tpu.memory_space<vmem>>, vector<16x8xbf16>
    tpu.vector_store %arg6[%c16_24, %c16_25], %120 {strides = array<i32>} : memref<32x64xbf16, #tpu.memory_space<vmem>>, vector<16x8xbf16>,
    %122 = vector.extract_strided_slice %112 {offsets = [3, 0, 0], sizes = [1, 16, 8], strides = [1, 1, 1]} : vector<8x16x8xbf16> to vector<1x16x8xbf16>
    %123 = vector.shape_cast %122 : vector<1x16x8xbf16> to vector<16x8xbf16>
    %c16_26 = arith.constant 16 : index
    %c24_27 = arith.constant 24 : index
    %124 = vector.load %arg6[%c16_26, %c24_27] : memref<32x64xbf16, #tpu.memory_space<vmem>>, vector<16x8xbf16>
    tpu.vector_store %arg6[%c16_26, %c24_27], %123 {strides = array<i32>} : memref<32x64xbf16, #tpu.memory_space<vmem>>, vector<16x8xbf16>,
    %125 = vector.extract_strided_slice %112 {offsets = [4, 0, 0], sizes = [1, 16, 8], strides = [1, 1, 1]} : vector<8x16x8xbf16> to vector<1x16x8xbf16>
    %126 = vector.shape_cast %125 : vector<1x16x8xbf16> to vector<16x8xbf16>
    %c16_28 = arith.constant 16 : index
    %c32_29 = arith.constant 32 : index
    %127 = vector.load %arg6[%c16_28, %c32_29] : memref<32x64xbf16, #tpu.memory_space<vmem>>, vector<16x8xbf16>
    tpu.vector_store %arg6[%c16_28, %c32_29], %126 {strides = array<i32>} : memref<32x64xbf16, #tpu.memory_space<vmem>>, vector<16x8xbf16>,
    %128 = vector.extract_strided_slice %112 {offsets = [5, 0, 0], sizes = [1, 16, 8], strides = [1, 1, 1]} : vector<8x16x8xbf16> to vector<1x16x8xbf16>
    %129 = vector.shape_cast %128 : vector<1x16x8xbf16> to vector<16x8xbf16>
    %c16_30 = arith.constant 16 : index
    %c40_31 = arith.constant 40 : index
    %130 = vector.load %arg6[%c16_30, %c40_31] : memref<32x64xbf16, #tpu.memory_space<vmem>>, vector<16x8xbf16>
    tpu.vector_store %arg6[%c16_30, %c40_31], %129 {strides = array<i32>} : memref<32x64xbf16, #tpu.memory_space<vmem>>, vector<16x8xbf16>,
    %131 = vector.extract_strided_slice %112 {offsets = [6, 0, 0], sizes = [1, 16, 8], strides = [1, 1, 1]} : vector<8x16x8xbf16> to vector<1x16x8xbf16>
    %132 = vector.shape_cast %131 : vector<1x16x8xbf16> to vector<16x8xbf16>
    %c16_32 = arith.constant 16 : index
    %c48_33 = arith.constant 48 : index
    %133 = vector.load %arg6[%c16_32, %c48_33] : memref<32x64xbf16, #tpu.memory_space<vmem>>, vector<16x8xbf16>
    tpu.vector_store %arg6[%c16_32, %c48_33], %132 {strides = array<i32>} : memref<32x64xbf16, #tpu.memory_space<vmem>>, vector<16x8xbf16>,
    %134 = vector.extract_strided_slice %112 {offsets = [7, 0, 0], sizes = [1, 16, 8], strides = [1, 1, 1]} : vector<8x16x8xbf16> to vector<1x16x8xbf16>
    %135 = vector.shape_cast %134 : vector<1x16x8xbf16> to vector<16x8xbf16>
    %c16_34 = arith.constant 16 : index
    %c56_35 = arith.constant 56 : index
    %136 = vector.load %arg6[%c16_34, %c56_35] : memref<32x64xbf16, #tpu.memory_space<vmem>>, vector<16x8xbf16>
    tpu.vector_store %arg6[%c16_34, %c56_35], %135 {strides = array<i32>} : memref<32x64xbf16, #tpu.memory_space<vmem>>, vector<16x8xbf16>,
    %c0_36 = arith.constant 0 : index
    %c0_37 = arith.constant 0 : index
    %137 = vector.load %arg6[%c0_36, %c0_37] : memref<32x64xbf16, #tpu.memory_space<vmem>>, vector<32x64xbf16>
    %c0_38 = arith.constant 0 : index
    %c0_39 = arith.constant 0 : index
    %138 = vector.load %arg3[%c0_38, %c0_39] : memref<64x64xbf16, #tpu.memory_space<vmem>>, vector<64x64xbf16>
    %cst_40 = arith.constant dense<0.000000e+00> : vector<32x64xf32>
    %139 = tpu.matmul %137, %138, %cst_40 {dimension_numbers = #tpu.dot_dimension_numbers<[1], [0], [0], [1], [0, 0, 1, 1], [], []>} : vector<32x64xbf16>, vector<64x64xbf16>, vector<32x64xf32> -> vector<32x64xf32>
    %c0_41 = arith.constant 0 : index
    %c0_42 = arith.constant 0 : index
    %140 = vector.load %arg4[%c0_41, %c0_42] : memref<1x64xf32, #tpu.memory_space<vmem>>, vector<1x64xf32>
    %141 = vector.broadcast %140 : vector<1x64xf32> to vector<32x64xf32>
    %142 = arith.addf %139, %141 : vector<32x64xf32>
    %143 = arith.truncf %142 : vector<32x64xf32> to vector<32x64xbf16>
    %c0_43 = arith.constant 0 : index
    %c0_44 = arith.constant 0 : index
    %144 = vector.load %arg5[%c0_43, %c0_44] : memref<32x64xbf16, #tpu.memory_space<vmem>>, vector<32x64xbf16>
    tpu.vector_store %arg5[%c0_43, %c0_44], %143 {strides = array<i32>} : memref<32x64xbf16, #tpu.memory_space<vmem>>, vector<32x64xbf16>,
    return
  }
  func.func @transform_0(%arg0: i32) -> (i32, i32) {
    %c0_i32 = arith.constant 0 : i32
    %c0_i32_0 = arith.constant 0 : i32
    return %arg0, %c0_i32 : i32, i32
  }
  func.func @transform_1(%arg0: i32) -> (i32, i32) {
    %c0_i32 = arith.constant 0 : i32
    %c0_i32_0 = arith.constant 0 : i32
    %c0_i32_1 = arith.constant 0 : i32
    return %c0_i32, %c0_i32_0 : i32, i32
  }
  func.func @transform_2(%arg0: i32) -> (i32, i32) {
    %c0_i32 = arith.constant 0 : i32
    %c0_i32_0 = arith.constant 0 : i32
    %c0_i32_1 = arith.constant 0 : i32
    return %c0_i32, %c0_i32_0 : i32, i32
  }
  func.func @transform_3(%arg0: i32) -> (i32, i32) {
    %c0_i32 = arith.constant 0 : i32
    %c0_i32_0 = arith.constant 0 : i32
    %c0_i32_1 = arith.constant 0 : i32
    return %c0_i32, %c0_i32_0 : i32, i32
  }
  func.func @transform_4(%arg0: i32) -> (i32, i32) {
    %c0_i32 = arith.constant 0 : i32
    %c0_i32_0 = arith.constant 0 : i32
    return %arg0, %c0_i32 : i32, i32
  }
}

</mosaic_0001>

<llo_original>
// kernel: tpu_custom_call.1
$region0: #{tpu_custom_call.1}
  #allocation0 [shape = 'u32[]', space=smem, size = 0x4, offset = 0x4, fixed_abs, tag = 'smem constant byte address 0x4 - core index']
  #allocation1 [shape = 'u32[72,128]{1,0:T(1,128)}', space=vmem, size = 0x9000, scoped, tag = 'internal scratch']
  #allocation2 [shape = 'bf16[32,64]{1,0:T(8,128)(2,1)}', space=vmem, size = 0x2000, scoped, tag = 'scratch operand']
  %s0 = inlined_call_operand.hbm [shape: bf16[64,64], index: 0, kind: input, shape index: {}]
  %s1 = inlined_call_operand.hbm [shape: bf16[64,192], index: 1, kind: input, shape index: {}]
  %s2 = inlined_call_operand.hbm [shape: bf16[64,64], index: 2, kind: input, shape index: {}]
  %s3 = inlined_call_operand.vmem [shape: f32[1,64], index: 3, kind: input, shape index: {}]
  %s4 = inlined_call_operand.hbm [shape: bf16[64,64], index: 4, kind: output, shape index: {}]
  %s5 = sld [smem:[#allocation0]]
  $region61: #{tpu_custom_call.1} parent=0
    _
  %s7 = ssub.s32 1, %s5
  %s8 = scalar_select 0, %s7, %s5
  $region1: #{tpu_custom_call.1} parent=0
    #allocation3 [shape = 'u8[16384]{0}', space=vmem, size = 0x4000, scoped, tag = 'input window, operand 0']
    #allocation4 [shape = 's32[2]{0}', space=sflag, size = 0x8, scoped, tag = 'scoped memory for tpu_custom_call.1']
    #allocation5 [shape = 's32[2]{0}', space=sflag, size = 0x8, scoped, tag = 'scoped memory for tpu_custom_call.1']
    #allocation6 [shape = 'u8[32768]{0}', space=vmem, size = 0x8000, scoped, tag = 'input window, operand 1, single buffered']
    #allocation7 [shape = 's32[1]{0}', space=sflag, size = 0x4, scoped, tag = 'scoped memory for tpu_custom_call.1']
    #allocation8 [shape = 'u8[16384]{0}', space=vmem, size = 0x4000, scoped, tag = 'input window, operand 2, single buffered']
    #allocation9 [shape = 'u8[16384]{0}', space=vmem, size = 0x4000, scoped, tag = 'output window, operand 0']
    %9 = vsyncpa [#allocation4], 0
    %s10 = scalar_lea.sflag [#allocation4], 1
    %11 = vsyncpa %s10, 0
    %12 = vsyncpa [#allocation7], 0
    %13 = vsyncpa [#allocation5], 0
    %s14 = scalar_lea.sflag [#allocation5], 1
    %15 = vsyncpa %s14, 0
    loop: start=0, step=1, limit=4
    $region2: #{tpu_custom_call.1} parent=1 // loop_pre_header
      _
    $region3: #{tpu_custom_call.1} parent=1 // loop_header
      %s17 = sphi 0, %s21
      %p18 = scmp.ge.s32.totalorder %s17, 4
      %s27 = sphi 0, %s29
      %s30 = sphi 0, %s27
      %s31 = sphi 0, %s30
      %s47 = sphi 0, %s31
      %s51 = sphi 0, %s51
      %s53 = sphi 0, %s51
      %s54 = sphi 0, %s53
      %s68 = sphi 0, %s54
      %s72 = sphi 0, %s72
      %s74 = sphi 0, %s72
      %s75 = sphi 0, %s74
      %s89 = sphi 0, %s75
      %s93 = sphi 0, %s93
      %s95 = sphi 0, %s93
      %s96 = sphi 0, %s95
      %s110 = sphi 0, %s96
      %s116 = sphi 0, %s118
      %s119 = sphi 0, %s116
      %s120 = sphi 0, %s119
      %s136 = sphi 0, %s120
    $region4: #{tpu_custom_call.1} parent=1 // loop_header_branch
      %20 = sbr.rel (%p18) target = $region8
    $region5: #{tpu_custom_call.1} parent=1 // loop_body
      %s22 = ssub.s32 %s17, 1
      %s23 = ssub.s32 %s17, 2
      %s24 = sadd.s32 %s17, 1
      %s25 = ssub.s32 %s17, %s24
      %p26 = scmp.eq.s32.totalorder %s25, 0
      %s28 = sadd.s32 %s27, 1
      %s29 = scalar_select %p26, %s27, %s28
      %p32 = pneg %p26
      %p33 = scmp.eq.s32.totalorder %s17, 1
      %p34 = por %p32, %p33
      %p35 = scmp.ne.s32.totalorder %s27, %s30
      %p36 = scmp.eq.s32.totalorder %s17, 0
      %p37 = por %p35, %p36
      %p38 = scmp.ne.s32.totalorder %s27, %s30
      %p39 = scmp.eq.s32.totalorder %s22, 1
      %p40 = por %p38, %p39
      %p41 = scmp.ne.s32.totalorder %s30, %s31
      %p42 = scmp.eq.s32.totalorder %s22, 0
      %p43 = por %p41, %p42
      %p44 = scmp.ne.s32.totalorder %s30, %s31
      %p45 = scmp.eq.s32.totalorder %s23, 1
      %p46 = por %p44, %p45
      %p48 = scmp.ne.s32.totalorder %s31, %s47
      %p49 = scmp.eq.s32.totalorder %s23, 0
      %p50 = por %p48, %p49
      %s52 = sadd.s32 %s51, 1
      %p55 = scmp.eq.s32.totalorder %s17, 1
      %p56 = scmp.ne.s32.totalorder %s51, %s53
      %p57 = scmp.eq.s32.totalorder %s17, 0
      %p58 = por %p56, %p57
      %p59 = scmp.ne.s32.totalorder %s51, %s53
      %p60 = scmp.eq.s32.totalorder %s22, 1
      %p61 = por %p59, %p60
      %p62 = scmp.ne.s32.totalorder %s53, %s54
      %p63 = scmp.eq.s32.totalorder %s22, 0
      %p64 = por %p62, %p63
      %p65 = scmp.ne.s32.totalorder %s53, %s54
      %p66 = scmp.eq.s32.totalorder %s23, 1
      %p67 = por %p65, %p66
      %p69 = scmp.ne.s32.totalorder %s54, %s68
      %p70 = scmp.eq.s32.totalorder %s23, 0
      %p71 = por %p69, %p70
      %s73 = sadd.s32 %s72, 1
      %p76 = scmp.eq.s32.totalorder %s17, 1
      %p77 = scmp.ne.s32.totalorder %s72, %s74
      %p78 = scmp.eq.s32.totalorder %s17, 0
      %p79 = por %p77, %p78
      %p80 = scmp.ne.s32.totalorder %s72, %s74
      %p81 = scmp.eq.s32.totalorder %s22, 1
      %p82 = por %p80, %p81
      %p83 = scmp.ne.s32.totalorder %s74, %s75
      %p84 = scmp.eq.s32.totalorder %s22, 0
      %p85 = por %p83, %p84
      %p86 = scmp.ne.s32.totalorder %s74, %s75
      %p87 = scmp.eq.s32.totalorder %s23, 1
      %p88 = por %p86, %p87
      %p90 = scmp.ne.s32.totalorder %s75, %s89
      %p91 = scmp.eq.s32.totalorder %s23, 0
      %p92 = por %p90, %p91
      %s94 = sadd.s32 %s93, 1
      %p97 = scmp.eq.s32.totalorder %s17, 1
      %p98 = scmp.ne.s32.totalorder %s93, %s95
      %p99 = scmp.eq.s32.totalorder %s17, 0
      %p100 = por %p98, %p99
      %p101 = scmp.ne.s32.totalorder %s93, %s95
      %p102 = scmp.eq.s32.totalorder %s22, 1
      %p103 = por %p101, %p102
      %p104 = scmp.ne.s32.totalorder %s95, %s96
      %p105 = scmp.eq.s32.totalorder %s22, 0
      %p106 = por %p104, %p105
      %p107 = scmp.ne.s32.totalorder %s95, %s96
      %p108 = scmp.eq.s32.totalorder %s23, 1
      %p109 = por %p107, %p108
      %p111 = scmp.ne.s32.totalorder %s96, %s110
      %p112 = scmp.eq.s32.totalorder %s23, 0
      %p113 = por %p111, %p112
      %s114 = ssub.s32 %s17, %s24
      %p115 = scmp.eq.s32.totalorder %s114, 0
      %s117 = sadd.s32 %s116, 1
      %s118 = scalar_select %p115, %s116, %s117
      %p121 = pneg %p115
      %p122 = scmp.eq.s32.totalorder %s17, 1
      %p123 = por %p121, %p122
      %p124 = scmp.ne.s32.totalorder %s116, %s119
      %p125 = scmp.eq.s32.totalorder %s17, 0
      %p126 = por %p124, %p125
      %p127 = scmp.ne.s32.totalorder %s116, %s119
      %p128 = scmp.eq.s32.totalorder %s22, 1
      %p129 = por %p127, %p128
      %p130 = scmp.ne.s32.totalorder %s119, %s120
      %p131 = scmp.eq.s32.totalorder %s22, 0
      %p132 = por %p130, %p131
      %p133 = scmp.ne.s32.totalorder %s119, %s120
      %p134 = scmp.eq.s32.totalorder %s23, 1
      %p135 = por %p133, %p134
      %p137 = scmp.ne.s32.totalorder %s120, %s136
      %p138 = scmp.eq.s32.totalorder %s23, 0
      %p139 = por %p137, %p138
      %p140 = scmp.le.s32.totalorder 1, %s17
      %p141 = scmp.lt.s32.totalorder %s17, 3
      %p142 = pnand %p140, %p141
      %p143 = pneg %p142
      // Predicated region
      $region9: #{tpu_custom_call.1} parent=5 // pred_check
        _
      $region10: #{tpu_custom_call.1} parent=5 // pred_check_branch
        %145 = sbr.rel (%p142) target = $region12
      $region11: #{tpu_custom_call.1} parent=5 // pred_region
        %s146 = ssub.s32 %s17, 1
        // Predicated region
        $region13: #{tpu_custom_call.1} parent=11 // pred_check
          %p147 = pneg %p64
        $region14: #{tpu_custom_call.1} parent=11 // pred_check_branch
          %149 = sbr.rel (%p147) target = $region16
        $region15: #{tpu_custom_call.1} parent=11 // pred_region
          %151 = vsyncadd [#allocation7], 0
          %s152 = sshll.u32 %s1, 4
          %s153 = int_to_ptr.hbm [resolvable:$true] %s152
          %s154 = sshll.u32 [#allocation6], 4
          %s155 = int_to_ptr.vmem [resolvable:$true] %s154
          %160 = dma.hbm_to_vmem [thread:$0]  %s153, 1024, %s155, [#allocation7], 128, 128, 8
        $region16: #{tpu_custom_call.1} parent=11 // pred_fallthru
          _
        // Predicated region
        $region17: #{tpu_custom_call.1} parent=11 // pred_check
          %p161 = pneg %p85
        $region18: #{tpu_custom_call.1} parent=11 // pred_check_branch
          %163 = sbr.rel (%p161) target = $region20
        $region19: #{tpu_custom_call.1} parent=11 // pred_region
          %165 = vsyncadd [#allocation7], 0
          %s166 = sshll.u32 %s2, 4
          %s167 = int_to_ptr.hbm [resolvable:$true] %s166
          %s168 = sshll.u32 [#allocation8], 4
          %s169 = int_to_ptr.vmem [resolvable:$true] %s168
          %174 = dma.hbm_to_vmem [thread:$0]  %s167, 512, %s169, [#allocation7], 64, 64, 4
        $region20: #{tpu_custom_call.1} parent=11 // pred_fallthru
          _
        // Predicated region
        $region21: #{tpu_custom_call.1} parent=11 // pred_check
          %p175 = pneg %p106
        $region22: #{tpu_custom_call.1} parent=11 // pred_check_branch
          %177 = sbr.rel (%p175) target = $region24
        $region23: #{tpu_custom_call.1} parent=11 // pred_region
          _
        $region24: #{tpu_custom_call.1} parent=11 // pred_fallthru
          _
      $region12: #{tpu_custom_call.1} parent=5 // pred_fallthru
        _
      %p178 = scmp.lt.s32.totalorder %s17, 2
      // Predicated region
      $region25: #{tpu_custom_call.1} parent=5 // pred_check
        %p179 = pneg %p178
      $region26: #{tpu_custom_call.1} parent=5 // pred_check_branch
        %181 = sbr.rel (%p179) target = $region28
      $region27: #{tpu_custom_call.1} parent=5 // pred_region
        // Predicated region
        $region29: #{tpu_custom_call.1} parent=27 // pred_check
          %p182 = pneg %p37
        $region30: #{tpu_custom_call.1} parent=27 // pred_check_branch
          %184 = sbr.rel (%p182) target = $region32
        $region31: #{tpu_custom_call.1} parent=27 // pred_region
          %s185 = sand.u32 %s27, 1
          %s186 = scalar_lea.sflag [#allocation4], %s185
          %s187 = sand.u32 %s27, 1
          %s188 = smul.addr %s187, 16
          %s189 = scalar_lea.vmem [#allocation3], %s188
          %s190 = smul.u32 4, %s17
          %192 = vsyncadd %s186, 0
          %s193 = smul.addr %s190, 4
          %s194 = scalar_lea.hbm %s0, %s193
          %s195 = sshll.u32 %s194, 4
          %s196 = int_to_ptr.hbm [resolvable:$true] %s195
          %s197 = sshll.u32 %s189, 4
          %s198 = int_to_ptr.vmem [resolvable:$true] %s197
          %203 = dma.hbm_to_vmem [thread:$0]  %s196, 256, %s198, %s186, 64, 64, 4
        $region32: #{tpu_custom_call.1} parent=27 // pred_fallthru
          _
      $region28: #{tpu_custom_call.1} parent=5 // pred_fallthru
        _
      %p204 = scmp.le.s32.totalorder 1, %s17
      %p205 = scmp.lt.s32.totalorder %s17, 3
      %p206 = pnand %p204, %p205
      %p207 = pneg %p206
      // Predicated region
      $region33: #{tpu_custom_call.1} parent=5 // pred_check
        _
      $region34: #{tpu_custom_call.1} parent=5 // pred_check_branch
        %209 = sbr.rel (%p206) target = $region36
      $region35: #{tpu_custom_call.1} parent=5 // pred_region
        %s210 = ssub.s32 %s17, 1
        %s211 = sand.u32 %s30, 1
        %s212 = scalar_lea.sflag [#allocation4], %s211
        %s213 = sand.u32 %s30, 1
        %s214 = smul.addr %s213, 16
        %s215 = scalar_lea.vmem [#allocation3], %s214
        // Predicated region
        $region37: #{tpu_custom_call.1} parent=35 // pred_check
          %p216 = pneg %p43
        $region38: #{tpu_custom_call.1} parent=35 // pred_check_branch
          %218 = sbr.rel (%p216) target = $region40
        $region39: #{tpu_custom_call.1} parent=35 // pred_region
          %220 = dma.done %s212, 256
        $region40: #{tpu_custom_call.1} parent=35 // pred_fallthru
          _
        // Predicated region
        $region41: #{tpu_custom_call.1} parent=35 // pred_check
          %p221 = pneg %p64
        $region42: #{tpu_custom_call.1} parent=35 // pred_check_branch
          %223 = sbr.rel (%p221) target = $region44
        $region43: #{tpu_custom_call.1} parent=35 // pred_region
          %225 = dma.done [#allocation7], 1024
        $region44: #{tpu_custom_call.1} parent=35 // pred_fallthru
          _
        // Predicated region
        $region45: #{tpu_custom_call.1} parent=35 // pred_check
          %p226 = pneg %p85
        $region46: #{tpu_custom_call.1} parent=35 // pred_check_branch
          %228 = sbr.rel (%p226) target = $region48
        $region47: #{tpu_custom_call.1} parent=35 // pred_region
          %230 = dma.done [#allocation7], 512
        $region48: #{tpu_custom_call.1} parent=35 // pred_fallthru
          _
        %s231 = sand.u32 %s30, 1
        %s232 = scalar_lea.sflag [#allocation4], %s231
        %s233 = sand.u32 %s30, 1
        %s234 = smul.addr %s233, 16
        %s235 = scalar_lea.vmem [#allocation3], %s234
        %p236 = pneg %p43
        %p237 = pneg %p40
        %p238 = pneg %p64
        %p239 = pneg %p61
        %p240 = pneg %p85
        %p241 = pneg %p82
        %p242 = pneg %p106
        %p243 = pneg %p103
        %p244 = pneg %p132
        %p245 = pneg %p129
        %s246 = sand.u32 %s119, 1
        %s247 = scalar_lea.sflag [#allocation5], %s246
        %s248 = sand.u32 %s119, 1
        %s249 = smul.addr %s248, 16
        %s250 = scalar_lea.vmem [#allocation9], %s249
        %s251 = smul.u32 4, %s22
        %s252 = smul.u32 4, %s22
        %v254 = vld [vmem:[%s215] sm:$0xf]
        %v255 = vld [vmem:[%s215 + $0x4] sm:$0xf]
        %v256 = vld [vmem:[%s215 + $0x8] sm:$0xf]
        %v257 = vld [vmem:[%s215 + $0xc] sm:$0xf]
        %v258 = vld [vmem:[#allocation6] sm:$0xff]
        %v259 = vld [vmem:[#allocation6 + $0x8] sm:$0xff]
        %v260 = vld [vmem:[#allocation6 + $0x10] sm:$0xff]
        %v261 = vld [vmem:[#allocation6 + $0x18] sm:$0xff]
        %v262 = vld [vmem:[#allocation6 + $0x20] sm:$0xff]
        %v263 = vld [vmem:[#allocation6 + $0x28] sm:$0xff]
        %v264 = vld [vmem:[#allocation6 + $0x30] sm:$0xff]
        %v265 = vld [vmem:[#allocation6 + $0x38] sm:$0xff]
        %v270 = vunpack.c.l.b16 %v254
        %v271 = vunpack.c.l.b16 %v255
        %v272 = vunpack.c.l.b16 %v256
        %v273 = vunpack.c.l.b16 %v257
        %v274 = vpack.c.b16 %v271, %v270
        %v275 = vpack.c.b16 %v273, %v272
        %v284 = vunpack.c.l.b16 %v258
        %v285 = vunpack.c.h.b16 %v258
        %v286 = vunpack.c.l.b16 %v259
        %v287 = vunpack.c.h.b16 %v259
        %v288 = vunpack.c.l.b16 %v260
        %v289 = vunpack.c.h.b16 %v260
        %v290 = vunpack.c.l.b16 %v261
        %v291 = vunpack.c.h.b16 %v261
        %v292 = vunpack.c.l.b16 %v262
        %v293 = vunpack.c.h.b16 %v262
        %v294 = vunpack.c.l.b16 %v263
        %v295 = vunpack.c.h.b16 %v263
        %v296 = vunpack.c.l.b16 %v264
        %v297 = vunpack.c.h.b16 %v264
        %v298 = vunpack.c.l.b16 %v265
        %v299 = vunpack.c.h.b16 %v265
        %v300 = vpack.c.b16 %v286, %v284
        %v301 = vpack.c.b16 %v287, %v285
        %v302 = vpack.c.b16 %v290, %v288
        %v303 = vpack.c.b16 %v291, %v289
        %v304 = vpack.c.b16 %v294, %v292
        %v305 = vpack.c.b16 %v295, %v293
        %v306 = vpack.c.b16 %v298, %v296
        %v307 = vpack.c.b16 %v299, %v297
        %vm316 = vcmask 523264
        %v318 = vsel %vm316, %v274, 0
        %v321 = vsel %vm316, %v275, 0
        %323 = vmatpush.bf16.msra.mxu0 0
        %324 = vmatpush.bf16.msra.mxu0 0
        %325 = vmatpush.bf16.msra.mxu0 0
        %326 = vmatpush.bf16.msra.mxu0 0
        %327 = vmatpush.bf16.msra.mxu0 %v306
        %328 = vmatpush.bf16.msra.mxu0 %v304
        %329 = vmatpush.bf16.msra.mxu0 %v302
        %330 = vmatpush.bf16.msra.mxu0 %v300
        %331 = vmatmul.bf16.gmra.mxu0 %v318
        %v332 = vpop.f32.mrf.mxu0
        %v333 = vadd.f32 0.0, %v332
        %v334 = vpop.f32.mrf.mxu0
        %v335 = vadd.f32 0.0, %v334
        %336 = vmatmul.bf16.gmra.mxu0 %v321
        %v337 = vpop.f32.mrf.mxu0
        %v338 = vadd.f32 0.0, %v337
        %v339 = vpop.f32.mrf.mxu0
        %v340 = vadd.f32 0.0, %v339
        %341 = vdwg.mxu0
        %342 = vmatpush.bf16.msra.mxu0 0
        %343 = vmatpush.bf16.msra.mxu0 0
        %344 = vmatpush.bf16.msra.mxu0 0
        %345 = vmatpush.bf16.msra.mxu0 0
        %346 = vmatpush.bf16.msra.mxu0 %v307
        %347 = vmatpush.bf16.msra.mxu0 %v305
        %348 = vmatpush.bf16.msra.mxu0 %v303
        %349 = vmatpush.bf16.msra.mxu0 %v301
        %350 = vmatmul.bf16.gmra.mxu0 %v318
        %v351 = vpop.f32.mrf.mxu0
        %v352 = vadd.f32 0.0, %v351
        %v353 = vpop.f32.mrf.mxu0
        %v354 = vadd.f32 0.0, %v353
        %355 = vmatmul.bf16.gmra.mxu0 %v321
        %v356 = vpop.f32.mrf.mxu0
        %v357 = vadd.f32 0.0, %v356
        %v358 = vpop.f32.mrf.mxu0
        %v359 = vadd.f32 0.0, %v358
        %360 = vdwg.mxu0
        %v361 = vpack.c.bf16 %v352, %v333
        %v362 = vpack.c.bf16 %v354, %v335
        %v363 = vpack.c.bf16 %v357, %v338
        %v364 = vpack.c.bf16 %v359, %v340
        %369 = vrot.lane.b32.xlu0 %v361, 120
        %v370 = vpop.permute.xlu0 %369
        %371 = vrot.lane.b32.xlu0 %v362, 120
        %v372 = vpop.permute.xlu0 %371
        %373 = vrot.lane.b32.xlu0 %v363, 120
        %v374 = vpop.permute.xlu0 %373
        %375 = vrot.lane.b32.xlu0 %v364, 120
        %v376 = vpop.permute.xlu0 %375
        %377 = vrot.lane.b32.xlu0 %v361, 112
        %v378 = vpop.permute.xlu0 %377
        %379 = vrot.lane.b32.xlu0 %v362, 112
        %v380 = vpop.permute.xlu0 %379
        %381 = vrot.lane.b32.xlu0 %v363, 112
        %v382 = vpop.permute.xlu0 %381
        %383 = vrot.lane.b32.xlu0 %v364, 112
        %v384 = vpop.permute.xlu0 %383
        %385 = vrot.lane.b32.xlu0 %v361, 104
        %v386 = vpop.permute.xlu0 %385
        %387 = vrot.lane.b32.xlu0 %v362, 104
        %v388 = vpop.permute.xlu0 %387
        %389 = vrot.lane.b32.xlu0 %v363, 104
        %v390 = vpop.permute.xlu0 %389
        %391 = vrot.lane.b32.xlu0 %v364, 104
        %v392 = vpop.permute.xlu0 %391
        %393 = vrot.lane.b32.xlu0 %v361, 96
        %v394 = vpop.permute.xlu0 %393
        %395 = vrot.lane.b32.xlu0 %v362, 96
        %v396 = vpop.permute.xlu0 %395
        %397 = vrot.lane.b32.xlu0 %v363, 96
        %v398 = vpop.permute.xlu0 %397
        %399 = vrot.lane.b32.xlu0 %v364, 96
        %v400 = vpop.permute.xlu0 %399
        %401 = vrot.lane.b32.xlu0 %v361, 88
        %v402 = vpop.permute.xlu0 %401
        %403 = vrot.lane.b32.xlu0 %v362, 88
        %v404 = vpop.permute.xlu0 %403
        %405 = vrot.lane.b32.xlu0 %v363, 88
        %v406 = vpop.permute.xlu0 %405
        %407 = vrot.lane.b32.xlu0 %v364, 88
        %v408 = vpop.permute.xlu0 %407
        %409 = vrot.lane.b32.xlu0 %v361, 80
        %v410 = vpop.permute.xlu0 %409
        %411 = vrot.lane.b32.xlu0 %v362, 80
        %v412 = vpop.permute.xlu0 %411
        %413 = vrot.lane.b32.xlu0 %v363, 80
        %v414 = vpop.permute.xlu0 %413
        %415 = vrot.lane.b32.xlu0 %v364, 80
        %v416 = vpop.permute.xlu0 %415
        %417 = vrot.lane.b32.xlu0 %v361, 72
        %v418 = vpop.permute.xlu0 %417
        %419 = vrot.lane.b32.xlu0 %v362, 72
        %v420 = vpop.permute.xlu0 %419
        %421 = vrot.lane.b32.xlu0 %v363, 72
        %v422 = vpop.permute.xlu0 %421
        %423 = vrot.lane.b32.xlu0 %v364, 72
        %v424 = vpop.permute.xlu0 %423
        %v425 = vrot.slane %v361, 4
        %v426 = vrot.slane %v362, 4
        %v427 = vrot.slane %v363, 4
        %v428 = vrot.slane %v364, 4
        %v429 = vrot.slane %v370, 4
        %v430 = vrot.slane %v372, 4
        %v431 = vrot.slane %v374, 4
        %v432 = vrot.slane %v376, 4
        %v433 = vrot.slane %v378, 4
        %v434 = vrot.slane %v380, 4
        %v435 = vrot.slane %v382, 4
        %v436 = vrot.slane %v384, 4
        %v437 = vrot.slane %v386, 4
        %v438 = vrot.slane %v388, 4
        %v439 = vrot.slane %v390, 4
        %v440 = vrot.slane %v392, 4
        %v441 = vrot.slane %v394, 4
        %v442 = vrot.slane %v396, 4
        %v443 = vrot.slane %v398, 4
        %v444 = vrot.slane %v400, 4
        %v445 = vrot.slane %v402, 4
        %v446 = vrot.slane %v404, 4
        %v447 = vrot.slane %v406, 4
        %v448 = vrot.slane %v408, 4
        %v449 = vrot.slane %v410, 4
        %v450 = vrot.slane %v412, 4
        %v451 = vrot.slane %v414, 4
        %v452 = vrot.slane %v416, 4
        %v453 = vrot.slane %v418, 4
        %v454 = vrot.slane %v420, 4
        %v455 = vrot.slane %v422, 4
        %v456 = vrot.slane %v424, 4
        %v457 = vunpack.c.l.b16 %v361
        %v458 = vunpack.c.l.b16 %v362
        %v459 = vpack.c.b16 %v458, %v457
        %460 = vrot.lane.b32.xlu0 %v459, 64
        %v461 = vpop.permute.xlu0 %460
        %vm462 = vcmask 64512
        %v464 = vsel %vm462, %v459, 0
        %v467 = vsel %vm462, %v461, 0
        %469 = vmatpush.bf16.xpose.msra.mxu0 0
        %470 = vmatpush.bf16.xpose.msra.mxu0 0
        %471 = vmatpush.bf16.xpose.msra.mxu0 0
        %472 = vmatpush.bf16.xpose.msra.mxu0 0
        %473 = vmatpush.bf16.xpose.msra.mxu0 0
        %474 = vmatpush.bf16.xpose.msra.mxu0 0
        %475 = vmatpush.bf16.xpose.msra.mxu0 0
        %476 = vmatpush.bf16.xpose.msra.mxu0 %v467
        %477 = vmatmul.bf16.gmra.mxu0 %v464
        %v478 = vpop.f32.mrf.mxu0
        %v479 = vadd.f32 0.0, %v478
        %v480 = vpop.f32.mrf.mxu0
        %v481 = vadd.f32 0.0, %v480
        %482 = vdwg.mxu0
        %v483 = vunpack.c.l.b16 %v370
        %v484 = vunpack.c.l.b16 %v372
        %v485 = vpack.c.b16 %v484, %v483
        %486 = vrot.lane.b32.xlu0 %v485, 64
        %v487 = vpop.permute.xlu0 %486
        %v489 = vsel %vm462, %v485, 0
        %v492 = vsel %vm462, %v487, 0
        %494 = vmatpush.bf16.xpose.msra.mxu0 0
        %495 = vmatpush.bf16.xpose.msra.mxu0 0
        %496 = vmatpush.bf16.xpose.msra.mxu0 0
        %497 = vmatpush.bf16.xpose.msra.mxu0 0
        %498 = vmatpush.bf16.xpose.msra.mxu0 0
        %499 = vmatpush.bf16.xpose.msra.mxu0 0
        %500 = vmatpush.bf16.xpose.msra.mxu0 0
        %501 = vmatpush.bf16.xpose.msra.mxu0 %v492
        %502 = vmatmul.bf16.gmra.mxu0 %v489
        %v503 = vpop.f32.mrf.mxu0
        %v504 = vadd.f32 0.0, %v503
        %v505 = vpop.f32.mrf.mxu0
        %v506 = vadd.f32 0.0, %v505
        %507 = vdwg.mxu0
        %v508 = vunpack.c.l.b16 %v378
        %v509 = vunpack.c.l.b16 %v380
        %v510 = vpack.c.b16 %v509, %v508
        %511 = vrot.lane.b32.xlu0 %v510, 64
        %v512 = vpop.permute.xlu0 %511
        %v514 = vsel %vm462, %v510, 0
        %v517 = vsel %vm462, %v512, 0
        %519 = vmatpush.bf16.xpose.msra.mxu0 0
        %520 = vmatpush.bf16.xpose.msra.mxu0 0
        %521 = vmatpush.bf16.xpose.msra.mxu0 0
        %522 = vmatpush.bf16.xpose.msra.mxu0 0
        %523 = vmatpush.bf16.xpose.msra.mxu0 0
        %524 = vmatpush.bf16.xpose.msra.mxu0 0
        %525 = vmatpush.bf16.xpose.msra.mxu0 0
        %526 = vmatpush.bf16.xpose.msra.mxu0 %v517
        %527 = vmatmul.bf16.gmra.mxu0 %v514
        %v528 = vpop.f32.mrf.mxu0
        %v529 = vadd.f32 0.0, %v528
        %v530 = vpop.f32.mrf.mxu0
        %v531 = vadd.f32 0.0, %v530
        %532 = vdwg.mxu0
        %v533 = vunpack.c.l.b16 %v386
        %v534 = vunpack.c.l.b16 %v388
        %v535 = vpack.c.b16 %v534, %v533
        %536 = vrot.lane.b32.xlu0 %v535, 64
        %v537 = vpop.permute.xlu0 %536
        %v539 = vsel %vm462, %v535, 0
        %v542 = vsel %vm462, %v537, 0
        %544 = vmatpush.bf16.xpose.msra.mxu0 0
        %545 = vmatpush.bf16.xpose.msra.mxu0 0
        %546 = vmatpush.bf16.xpose.msra.mxu0 0
        %547 = vmatpush.bf16.xpose.msra.mxu0 0
        %548 = vmatpush.bf16.xpose.msra.mxu0 0
        %549 = vmatpush.bf16.xpose.msra.mxu0 0
        %550 = vmatpush.bf16.xpose.msra.mxu0 0
        %551 = vmatpush.bf16.xpose.msra.mxu0 %v542
        %552 = vmatmul.bf16.gmra.mxu0 %v539
        %v553 = vpop.f32.mrf.mxu0
        %v554 = vadd.f32 0.0, %v553
        %v555 = vpop.f32.mrf.mxu0
        %v556 = vadd.f32 0.0, %v555
        %557 = vdwg.mxu0
        %v558 = vunpack.c.l.b16 %v394
        %v559 = vunpack.c.l.b16 %v396
        %v560 = vpack.c.b16 %v559, %v558
        %561 = vrot.lane.b32.xlu0 %v560, 64
        %v562 = vpop.permute.xlu0 %561
        %v564 = vsel %vm462, %v560, 0
        %v567 = vsel %vm462, %v562, 0
        %569 = vmatpush.bf16.xpose.msra.mxu0 0
        %570 = vmatpush.bf16.xpose.msra.mxu0 0
        %571 = vmatpush.bf16.xpose.msra.mxu0 0
        %572 = vmatpush.bf16.xpose.msra.mxu0 0
        %573 = vmatpush.bf16.xpose.msra.mxu0 0
        %574 = vmatpush.bf16.xpose.msra.mxu0 0
        %575 = vmatpush.bf16.xpose.msra.mxu0 0
        %576 = vmatpush.bf16.xpose.msra.mxu0 %v567
        %577 = vmatmul.bf16.gmra.mxu0 %v564
        %v578 = vpop.f32.mrf.mxu0
        %v579 = vadd.f32 0.0, %v578
        %v580 = vpop.f32.mrf.mxu0
        %v581 = vadd.f32 0.0, %v580
        %582 = vdwg.mxu0
        %v583 = vunpack.c.l.b16 %v402
        %v584 = vunpack.c.l.b16 %v404
        %v585 = vpack.c.b16 %v584, %v583
        %586 = vrot.lane.b32.xlu0 %v585, 64
        %v587 = vpop.permute.xlu0 %586
        %v589 = vsel %vm462, %v585, 0
        %v592 = vsel %vm462, %v587, 0
        %594 = vmatpush.bf16.xpose.msra.mxu0 0
        %595 = vmatpush.bf16.xpose.msra.mxu0 0
        %596 = vmatpush.bf16.xpose.msra.mxu0 0
        %597 = vmatpush.bf16.xpose.msra.mxu0 0
        %598 = vmatpush.bf16.xpose.msra.mxu0 0
        %599 = vmatpush.bf16.xpose.msra.mxu0 0
        %600 = vmatpush.bf16.xpose.msra.mxu0 0
        %601 = vmatpush.bf16.xpose.msra.mxu0 %v592
        %602 = vmatmul.bf16.gmra.mxu0 %v589
        %v603 = vpop.f32.mrf.mxu0
        %v604 = vadd.f32 0.0, %v603
        %v605 = vpop.f32.mrf.mxu0
        %v606 = vadd.f32 0.0, %v605
        %607 = vdwg.mxu0
        %v608 = vunpack.c.l.b16 %v410
        %v609 = vunpack.c.l.b16 %v412
        %v610 = vpack.c.b16 %v609, %v608
        %611 = vrot.lane.b32.xlu0 %v610, 64
        %v612 = vpop.permute.xlu0 %611
        %v614 = vsel %vm462, %v610, 0
        %v617 = vsel %vm462, %v612, 0
        %619 = vmatpush.bf16.xpose.msra.mxu0 0
        %620 = vmatpush.bf16.xpose.msra.mxu0 0
        %621 = vmatpush.bf16.xpose.msra.mxu0 0
        %622 = vmatpush.bf16.xpose.msra.mxu0 0
        %623 = vmatpush.bf16.xpose.msra.mxu0 0
        %624 = vmatpush.bf16.xpose.msra.mxu0 0
        %625 = vmatpush.bf16.xpose.msra.mxu0 0
        %626 = vmatpush.bf16.xpose.msra.mxu0 %v617
        %627 = vmatmul.bf16.gmra.mxu0 %v614
        %v628 = vpop.f32.mrf.mxu0
        %v629 = vadd.f32 0.0, %v628
        %v630 = vpop.f32.mrf.mxu0
        %v631 = vadd.f32 0.0, %v630
        %632 = vdwg.mxu0
        %v633 = vunpack.c.l.b16 %v418
        %v634 = vunpack.c.l.b16 %v420
        %v635 = vpack.c.b16 %v634, %v633
        %636 = vrot.lane.b32.xlu0 %v635, 64
        %v637 = vpop.permute.xlu0 %636
        %v639 = vsel %vm462, %v635, 0
        %v642 = vsel %vm462, %v637, 0
        %644 = vmatpush.bf16.xpose.msra.mxu0 0
        %645 = vmatpush.bf16.xpose.msra.mxu0 0
        %646 = vmatpush.bf16.xpose.msra.mxu0 0
        %647 = vmatpush.bf16.xpose.msra.mxu0 0
        %648 = vmatpush.bf16.xpose.msra.mxu0 0
        %649 = vmatpush.bf16.xpose.msra.mxu0 0
        %650 = vmatpush.bf16.xpose.msra.mxu0 0
        %651 = vmatpush.bf16.xpose.msra.mxu0 %v642
        %652 = vmatmul.bf16.gmra.mxu0 %v639
        %v653 = vpop.f32.mrf.mxu0
        %v654 = vadd.f32 0.0, %v653
        %v655 = vpop.f32.mrf.mxu0
        %v656 = vadd.f32 0.0, %v655
        %657 = vdwg.mxu0
        %vm658 = vcmask 130048
        %v659 = vsel %vm658, %v479, -inf
        %660 = vmax.xlane.f32.xlu0 %v659
        %v661 = vpop.xlane.xlu0 %660
        %v662 = vsel %vm658, %v481, -inf
        %663 = vmax.xlane.f32.xlu0 %v662
        %v664 = vpop.xlane.xlu0 %663
        %v665 = vsel %vm658, %v504, -inf
        %666 = vmax.xlane.f32.xlu0 %v665
        %v667 = vpop.xlane.xlu0 %666
        %v668 = vsel %vm658, %v506, -inf
        %669 = vmax.xlane.f32.xlu0 %v668
        %v670 = vpop.xlane.xlu0 %669
        %v671 = vsel %vm658, %v529, -inf
        %672 = vmax.xlane.f32.xlu0 %v671
        %v673 = vpop.xlane.xlu0 %672
        %v674 = vsel %vm658, %v531, -inf
        %675 = vmax.xlane.f32.xlu0 %v674
        %v676 = vpop.xlane.xlu0 %675
        %v677 = vsel %vm658, %v554, -inf
        %678 = vmax.xlane.f32.xlu0 %v677
        %v679 = vpop.xlane.xlu0 %678
        %v680 = vsel %vm658, %v556, -inf
        %681 = vmax.xlane.f32.xlu0 %v680
        %v682 = vpop.xlane.xlu0 %681
        %v683 = vsel %vm658, %v579, -inf
        %684 = vmax.xlane.f32.xlu0 %v683
        %v685 = vpop.xlane.xlu0 %684
        %v686 = vsel %vm658, %v581, -inf
        %687 = vmax.xlane.f32.xlu0 %v686
        %v688 = vpop.xlane.xlu0 %687
        %v689 = vsel %vm658, %v604, -inf
        %690 = vmax.xlane.f32.xlu0 %v689
        %v691 = vpop.xlane.xlu0 %690
        %v692 = vsel %vm658, %v606, -inf
        %693 = vmax.xlane.f32.xlu0 %v692
        %v694 = vpop.xlane.xlu0 %693
        %v695 = vsel %vm658, %v629, -inf
        %696 = vmax.xlane.f32.xlu0 %v695
        %v697 = vpop.xlane.xlu0 %696
        %v698 = vsel %vm658, %v631, -inf
        %699 = vmax.xlane.f32.xlu0 %v698
        %v700 = vpop.xlane.xlu0 %699
        %v701 = vsel %vm658, %v654, -inf
        %702 = vmax.xlane.f32.xlu0 %v701
        %v703 = vpop.xlane.xlu0 %702
        %v704 = vsel %vm658, %v656, -inf
        %705 = vmax.xlane.f32.xlu0 %v704
        %v706 = vpop.xlane.xlu0 %705
        %v707 = vsub.f32 %v479, %v661
        %v708 = vsub.f32 %v481, %v664
        %v709 = vsub.f32 %v504, %v667
        %v710 = vsub.f32 %v506, %v670
        %v711 = vsub.f32 %v529, %v673
        %v712 = vsub.f32 %v531, %v676
        %v713 = vsub.f32 %v554, %v679
        %v714 = vsub.f32 %v556, %v682
        %v715 = vsub.f32 %v579, %v685
        %v716 = vsub.f32 %v581, %v688
        %v717 = vsub.f32 %v604, %v691
        %v718 = vsub.f32 %v606, %v694
        %v719 = vsub.f32 %v629, %v697
        %v720 = vsub.f32 %v631, %v700
        %v721 = vsub.f32 %v654, %v703
        %v722 = vsub.f32 %v656, %v706
        %v723 = vmul.f32 %v707, 1.442695
        %v724 = vpow.pop %v723
        %v725 = vmul.f32 %v708, 1.442695
        %v726 = vpow.pop %v725
        %v727 = vmul.f32 %v709, 1.442695
        %v728 = vpow.pop %v727
        %v729 = vmul.f32 %v710, 1.442695
        %v730 = vpow.pop %v729
        %v731 = vmul.f32 %v711, 1.442695
        %v732 = vpow.pop %v731
        %v733 = vmul.f32 %v712, 1.442695
        %v734 = vpow.pop %v733
        %v735 = vmul.f32 %v713, 1.442695
        %v736 = vpow.pop %v735
        %v737 = vmul.f32 %v714, 1.442695
        %v738 = vpow.pop %v737
        %v739 = vmul.f32 %v715, 1.442695
        %v740 = vpow.pop %v739
        %v741 = vmul.f32 %v716, 1.442695
        %v742 = vpow.pop %v741
        %v743 = vmul.f32 %v717, 1.442695
        %v744 = vpow.pop %v743
        %v745 = vmul.f32 %v718, 1.442695
        %v746 = vpow.pop %v745
        %v747 = vmul.f32 %v719, 1.442695
        %v748 = vpow.pop %v747
        %v749 = vmul.f32 %v720, 1.442695
        %v750 = vpow.pop %v749
        %v751 = vmul.f32 %v721, 1.442695
        %v752 = vpow.pop %v751
        %v753 = vmul.f32 %v722, 1.442695
        %v754 = vpow.pop %v753
        %v755 = vsel %vm658, %v724, 0.0
        %756 = vadd.xlane.f32.xlu0 %v755
        %v757 = vpop.xlane.xlu0 %756
        %v758 = vsel %vm658, %v726, 0.0
        %759 = vadd.xlane.f32.xlu0 %v758
        %v760 = vpop.xlane.xlu0 %759
        %v761 = vsel %vm658, %v728, 0.0
        %762 = vadd.xlane.f32.xlu0 %v761
        %v763 = vpop.xlane.xlu0 %762
        %v764 = vsel %vm658, %v730, 0.0
        %765 = vadd.xlane.f32.xlu0 %v764
        %v766 = vpop.xlane.xlu0 %765
        %v767 = vsel %vm658, %v732, 0.0
        %768 = vadd.xlane.f32.xlu0 %v767
        %v769 = vpop.xlane.xlu0 %768
        %v770 = vsel %vm658, %v734, 0.0
        %771 = vadd.xlane.f32.xlu0 %v770
        %v772 = vpop.xlane.xlu0 %771
        %v773 = vsel %vm658, %v736, 0.0
        %774 = vadd.xlane.f32.xlu0 %v773
        %v775 = vpop.xlane.xlu0 %774
        %v776 = vsel %vm658, %v738, 0.0
        %777 = vadd.xlane.f32.xlu0 %v776
        %v778 = vpop.xlane.xlu0 %777
        %v779 = vsel %vm658, %v740, 0.0
        %780 = vadd.xlane.f32.xlu0 %v779
        %v781 = vpop.xlane.xlu0 %780
        %v782 = vsel %vm658, %v742, 0.0
        %783 = vadd.xlane.f32.xlu0 %v782
        %v784 = vpop.xlane.xlu0 %783
        %v785 = vsel %vm658, %v744, 0.0
        %786 = vadd.xlane.f32.xlu0 %v785
        %v787 = vpop.xlane.xlu0 %786
        %v788 = vsel %vm658, %v746, 0.0
        %789 = vadd.xlane.f32.xlu0 %v788
        %v790 = vpop.xlane.xlu0 %789
        %v791 = vsel %vm658, %v748, 0.0
        %792 = vadd.xlane.f32.xlu0 %v791
        %v793 = vpop.xlane.xlu0 %792
        %v794 = vsel %vm658, %v750, 0.0
        %795 = vadd.xlane.f32.xlu0 %v794
        %v796 = vpop.xlane.xlu0 %795
        %v797 = vsel %vm658, %v752, 0.0
        %798 = vadd.xlane.f32.xlu0 %v797
        %v799 = vpop.xlane.xlu0 %798
        %v800 = vsel %vm658, %v754, 0.0
        %801 = vadd.xlane.f32.xlu0 %v800
        %v802 = vpop.xlane.xlu0 %801
        %v803 = vrcp.pop %v757
        %v804 = vrcp.pop %v760
        %v805 = vrcp.pop %v763
        %v806 = vrcp.pop %v766
        %v807 = vrcp.pop %v769
        %v808 = vrcp.pop %v772
        %v809 = vrcp.pop %v775
        %v810 = vrcp.pop %v778
        %v811 = vrcp.pop %v781
        %v812 = vrcp.pop %v784
        %v813 = vrcp.pop %v787
        %v814 = vrcp.pop %v790
        %v815 = vrcp.pop %v793
        %v816 = vrcp.pop %v796
        %v817 = vrcp.pop %v799
        %v818 = vrcp.pop %v802
        %v819 = vmul.f32 %v724, %v803
        %v820 = vmul.f32 %v726, %v804
        %v821 = vmul.f32 %v728, %v805
        %v822 = vmul.f32 %v730, %v806
        %v823 = vmul.f32 %v732, %v807
        %v824 = vmul.f32 %v734, %v808
        %v825 = vmul.f32 %v736, %v809
        %v826 = vmul.f32 %v738, %v810
        %v827 = vmul.f32 %v740, %v811
        %v828 = vmul.f32 %v742, %v812
        %v829 = vmul.f32 %v744, %v813
        %v830 = vmul.f32 %v746, %v814
        %v831 = vmul.f32 %v748, %v815
        %v832 = vmul.f32 %v750, %v816
        %v833 = vmul.f32 %v752, %v817
        %v834 = vmul.f32 %v754, %v818
        %v835 = vpack.c.bf16 %v819, %v819
        %v836 = vpack.c.bf16 %v820, %v820
        %v837 = vpack.c.bf16 %v821, %v821
        %v838 = vpack.c.bf16 %v822, %v822
        %v839 = vpack.c.bf16 %v823, %v823
        %v840 = vpack.c.bf16 %v824, %v824
        %v841 = vpack.c.bf16 %v825, %v825
        %v842 = vpack.c.bf16 %v826, %v826
        %v843 = vpack.c.bf16 %v827, %v827
        %v844 = vpack.c.bf16 %v828, %v828
        %v845 = vpack.c.bf16 %v829, %v829
        %v846 = vpack.c.bf16 %v830, %v830
        %v847 = vpack.c.bf16 %v831, %v831
        %v848 = vpack.c.bf16 %v832, %v832
        %v849 = vpack.c.bf16 %v833, %v833
        %v850 = vpack.c.bf16 %v834, %v834
        %v853 = vunpack.c.l.b16 %v835
        %v854 = vunpack.c.l.b16 %v836
        %v855 = vpack.c.b16 %v854, %v853
        %v856 = vunpack.c.l.b16 %v425
        %v857 = vunpack.c.l.b16 %v426
        %v858 = vpack.c.b16 %v857, %v856
        %v861 = vsel %vm658, %v855, 0
        %863 = vmatpush.bf16.msra.mxu0 0
        %864 = vmatpush.bf16.msra.mxu0 0
        %865 = vmatpush.bf16.msra.mxu0 0
        %866 = vmatpush.bf16.msra.mxu0 0
        %867 = vmatpush.bf16.msra.mxu0 0
        %868 = vmatpush.bf16.msra.mxu0 0
        %869 = vmatpush.bf16.msra.mxu0 0
        %870 = vmatpush.bf16.msra.mxu0 %v858
        %871 = vmatmul.bf16.gmra.mxu0 %v861
        %v872 = vpop.f32.mrf.mxu0
        %v873 = vadd.f32 0.0, %v872
        %v874 = vpop.f32.mrf.mxu0
        %v875 = vadd.f32 0.0, %v874
        %876 = vdwg.mxu0
        %v879 = vunpack.c.l.b16 %v837
        %v880 = vunpack.c.l.b16 %v838
        %v881 = vpack.c.b16 %v880, %v879
        %v882 = vunpack.c.l.b16 %v429
        %v883 = vunpack.c.l.b16 %v430
        %v884 = vpack.c.b16 %v883, %v882
        %v887 = vsel %vm658, %v881, 0
        %889 = vmatpush.bf16.msra.mxu0 0
        %890 = vmatpush.bf16.msra.mxu0 0
        %891 = vmatpush.bf16.msra.mxu0 0
        %892 = vmatpush.bf16.msra.mxu0 0
        %893 = vmatpush.bf16.msra.mxu0 0
        %894 = vmatpush.bf16.msra.mxu0 0
        %895 = vmatpush.bf16.msra.mxu0 0
        %896 = vmatpush.bf16.msra.mxu0 %v884
        %897 = vmatmul.bf16.gmra.mxu0 %v887
        %v898 = vpop.f32.mrf.mxu0
        %v899 = vadd.f32 0.0, %v898
        %v900 = vpop.f32.mrf.mxu0
        %v901 = vadd.f32 0.0, %v900
        %902 = vdwg.mxu0
        %v905 = vunpack.c.l.b16 %v839
        %v906 = vunpack.c.l.b16 %v840
        %v907 = vpack.c.b16 %v906, %v905
        %v908 = vunpack.c.l.b16 %v433
        %v909 = vunpack.c.l.b16 %v434
        %v910 = vpack.c.b16 %v909, %v908
        %v913 = vsel %vm658, %v907, 0
        %915 = vmatpush.bf16.msra.mxu0 0
        %916 = vmatpush.bf16.msra.mxu0 0
        %917 = vmatpush.bf16.msra.mxu0 0
        %918 = vmatpush.bf16.msra.mxu0 0
        %919 = vmatpush.bf16.msra.mxu0 0
        %920 = vmatpush.bf16.msra.mxu0 0
        %921 = vmatpush.bf16.msra.mxu0 0
        %922 = vmatpush.bf16.msra.mxu0 %v910
        %923 = vmatmul.bf16.gmra.mxu0 %v913
        %v924 = vpop.f32.mrf.mxu0
        %v925 = vadd.f32 0.0, %v924
        %v926 = vpop.f32.mrf.mxu0
        %v927 = vadd.f32 0.0, %v926
        %928 = vdwg.mxu0
        %v931 = vunpack.c.l.b16 %v841
        %v932 = vunpack.c.l.b16 %v842
        %v933 = vpack.c.b16 %v932, %v931
        %v934 = vunpack.c.l.b16 %v437
        %v935 = vunpack.c.l.b16 %v438
        %v936 = vpack.c.b16 %v935, %v934
        %v939 = vsel %vm658, %v933, 0
        %941 = vmatpush.bf16.msra.mxu0 0
        %942 = vmatpush.bf16.msra.mxu0 0
        %943 = vmatpush.bf16.msra.mxu0 0
        %944 = vmatpush.bf16.msra.mxu0 0
        %945 = vmatpush.bf16.msra.mxu0 0
        %946 = vmatpush.bf16.msra.mxu0 0
        %947 = vmatpush.bf16.msra.mxu0 0
        %948 = vmatpush.bf16.msra.mxu0 %v936
        %949 = vmatmul.bf16.gmra.mxu0 %v939
        %v950 = vpop.f32.mrf.mxu0
        %v951 = vadd.f32 0.0, %v950
        %v952 = vpop.f32.mrf.mxu0
        %v953 = vadd.f32 0.0, %v952
        %954 = vdwg.mxu0
        %v957 = vunpack.c.l.b16 %v843
        %v958 = vunpack.c.l.b16 %v844
        %v959 = vpack.c.b16 %v958, %v957
        %v960 = vunpack.c.l.b16 %v441
        %v961 = vunpack.c.l.b16 %v442
        %v962 = vpack.c.b16 %v961, %v960
        %v965 = vsel %vm658, %v959, 0
        %967 = vmatpush.bf16.msra.mxu0 0
        %968 = vmatpush.bf16.msra.mxu0 0
        %969 = vmatpush.bf16.msra.mxu0 0
        %970 = vmatpush.bf16.msra.mxu0 0
        %971 = vmatpush.bf16.msra.mxu0 0
        %972 = vmatpush.bf16.msra.mxu0 0
        %973 = vmatpush.bf16.msra.mxu0 0
        %974 = vmatpush.bf16.msra.mxu0 %v962
        %975 = vmatmul.bf16.gmra.mxu0 %v965
        %v976 = vpop.f32.mrf.mxu0
        %v977 = vadd.f32 0.0, %v976
        %v978 = vpop.f32.mrf.mxu0
        %v979 = vadd.f32 0.0, %v978
        %980 = vdwg.mxu0
        %v983 = vunpack.c.l.b16 %v845
        %v984 = vunpack.c.l.b16 %v846
        %v985 = vpack.c.b16 %v984, %v983
        %v986 = vunpack.c.l.b16 %v445
        %v987 = vunpack.c.l.b16 %v446
        %v988 = vpack.c.b16 %v987, %v986
        %v991 = vsel %vm658, %v985, 0
        %993 = vmatpush.bf16.msra.mxu0 0
        %994 = vmatpush.bf16.msra.mxu0 0
        %995 = vmatpush.bf16.msra.mxu0 0
        %996 = vmatpush.bf16.msra.mxu0 0
        %997 = vmatpush.bf16.msra.mxu0 0
        %998 = vmatpush.bf16.msra.mxu0 0
        %999 = vmatpush.bf16.msra.mxu0 0
        %1000 = vmatpush.bf16.msra.mxu0 %v988
        %1001 = vmatmul.bf16.gmra.mxu0 %v991
        %v1002 = vpop.f32.mrf.mxu0
        %v1003 = vadd.f32 0.0, %v1002
        %v1004 = vpop.f32.mrf.mxu0
        %v1005 = vadd.f32 0.0, %v1004
        %1006 = vdwg.mxu0
        %v1009 = vunpack.c.l.b16 %v847
        %v1010 = vunpack.c.l.b16 %v848
        %v1011 = vpack.c.b16 %v1010, %v1009
        %v1012 = vunpack.c.l.b16 %v449
        %v1013 = vunpack.c.l.b16 %v450
        %v1014 = vpack.c.b16 %v1013, %v1012
        %v1017 = vsel %vm658, %v1011, 0
        %1019 = vmatpush.bf16.msra.mxu0 0
        %1020 = vmatpush.bf16.msra.mxu0 0
        %1021 = vmatpush.bf16.msra.mxu0 0
        %1022 = vmatpush.bf16.msra.mxu0 0
        %1023 = vmatpush.bf16.msra.mxu0 0
        %1024 = vmatpush.bf16.msra.mxu0 0
        %1025 = vmatpush.bf16.msra.mxu0 0
        %1026 = vmatpush.bf16.msra.mxu0 %v1014
        %1027 = vmatmul.bf16.gmra.mxu0 %v1017
        %v1028 = vpop.f32.mrf.mxu0
        %v1029 = vadd.f32 0.0, %v1028
        %v1030 = vpop.f32.mrf.mxu0
        %v1031 = vadd.f32 0.0, %v1030
        %1032 = vdwg.mxu0
        %v1035 = vunpack.c.l.b16 %v849
        %v1036 = vunpack.c.l.b16 %v850
        %v1037 = vpack.c.b16 %v1036, %v1035
        %v1038 = vunpack.c.l.b16 %v453
        %v1039 = vunpack.c.l.b16 %v454
        %v1040 = vpack.c.b16 %v1039, %v1038
        %v1043 = vsel %vm658, %v1037, 0
        %1045 = vmatpush.bf16.msra.mxu0 0
        %1046 = vmatpush.bf16.msra.mxu0 0
        %1047 = vmatpush.bf16.msra.mxu0 0
        %1048 = vmatpush.bf16.msra.mxu0 0
        %1049 = vmatpush.bf16.msra.mxu0 0
        %1050 = vmatpush.bf16.msra.mxu0 0
        %1051 = vmatpush.bf16.msra.mxu0 0
        %1052 = vmatpush.bf16.msra.mxu0 %v1040
        %1053 = vmatmul.bf16.gmra.mxu0 %v1043
        %v1054 = vpop.f32.mrf.mxu0
        %v1055 = vadd.f32 0.0, %v1054
        %v1056 = vpop.f32.mrf.mxu0
        %v1057 = vadd.f32 0.0, %v1056
        %1058 = vdwg.mxu0
        %v1059 = vpack.c.bf16 %v873, %v873
        %v1060 = vpack.c.bf16 %v875, %v875
        %v1061 = vpack.c.bf16 %v899, %v899
        %v1062 = vpack.c.bf16 %v901, %v901
        %v1063 = vpack.c.bf16 %v925, %v925
        %v1064 = vpack.c.bf16 %v927, %v927
        %v1065 = vpack.c.bf16 %v951, %v951
        %v1066 = vpack.c.bf16 %v953, %v953
        %v1067 = vpack.c.bf16 %v977, %v977
        %v1068 = vpack.c.bf16 %v979, %v979
        %v1069 = vpack.c.bf16 %v1003, %v1003
        %v1070 = vpack.c.bf16 %v1005, %v1005
        %v1071 = vpack.c.bf16 %v1029, %v1029
        %v1072 = vpack.c.bf16 %v1031, %v1031
        %v1073 = vpack.c.bf16 %v1055, %v1055
        %v1074 = vpack.c.bf16 %v1057, %v1057
        %vm1075 = vcmask 60416
        %1076 = vst.msk [vmem:[#allocation2] sm:$0xf] %vm1075, %v1059
        %1077 = vst.msk [vmem:[#allocation2 + $0x4] sm:$0xf] %vm1075, %v1060
        %1080 = vrot.lane.b32.xlu0 %v1061, 8
        %v1081 = vpop.permute.xlu0 %1080
        %1082 = vrot.lane.b32.xlu0 %v1062, 8
        %v1083 = vpop.permute.xlu0 %1082
        %vm1086 = vcmask 126016
        %1087 = vst.msk [vmem:[#allocation2] sm:$0xf] %vm1086, %v1081
        %1088 = vst.msk [vmem:[#allocation2 + $0x4] sm:$0xf] %vm1086, %v1083
        %1091 = vrot.lane.b32.xlu0 %v1063, 16
        %v1092 = vpop.permute.xlu0 %1091
        %1093 = vrot.lane.b32.xlu0 %v1064, 16
        %v1094 = vpop.permute.xlu0 %1093
        %vm1097 = vcmask 191616
        %1098 = vst.msk [vmem:[#allocation2] sm:$0xf] %vm1097, %v1092
        %1099 = vst.msk [vmem:[#allocation2 + $0x4] sm:$0xf] %vm1097, %v1094
        %1102 = vrot.lane.b32.xlu0 %v1065, 24
        %v1103 = vpop.permute.xlu0 %1102
        %1104 = vrot.lane.b32.xlu0 %v1066, 24
        %v1105 = vpop.permute.xlu0 %1104
        %vm1108 = vcmask 257216
        %1109 = vst.msk [vmem:[#allocation2] sm:$0xf] %vm1108, %v1103
        %1110 = vst.msk [vmem:[#allocation2 + $0x4] sm:$0xf] %vm1108, %v1105
        %1113 = vrot.lane.b32.xlu0 %v1067, 32
        %v1114 = vpop.permute.xlu0 %1113
        %1115 = vrot.lane.b32.xlu0 %v1068, 32
        %v1116 = vpop.permute.xlu0 %1115
        %vm1119 = vcmask 322816
        %1120 = vst.msk [vmem:[#allocation2] sm:$0xf] %vm1119, %v1114
        %1121 = vst.msk [vmem:[#allocation2 + $0x4] sm:$0xf] %vm1119, %v1116
        %1124 = vrot.lane.b32.xlu0 %v1069, 40
        %v1125 = vpop.permute.xlu0 %1124
        %1126 = vrot.lane.b32.xlu0 %v1070, 40
        %v1127 = vpop.permute.xlu0 %1126
        %vm1130 = vcmask 388416
        %1131 = vst.msk [vmem:[#allocation2] sm:$0xf] %vm1130, %v1125
        %1132 = vst.msk [vmem:[#allocation2 + $0x4] sm:$0xf] %vm1130, %v1127
        %1135 = vrot.lane.b32.xlu0 %v1071, 48
        %v1136 = vpop.permute.xlu0 %1135
        %1137 = vrot.lane.b32.xlu0 %v1072, 48
        %v1138 = vpop.permute.xlu0 %1137
        %vm1141 = vcmask 454016
        %1142 = vst.msk [vmem:[#allocation2] sm:$0xf] %vm1141, %v1136
        %1143 = vst.msk [vmem:[#allocation2 + $0x4] sm:$0xf] %vm1141, %v1138
        %1146 = vrot.lane.b32.xlu0 %v1073, 56
        %v1147 = vpop.permute.xlu0 %1146
        %1148 = vrot.lane.b32.xlu0 %v1074, 56
        %v1149 = vpop.permute.xlu0 %1148
        %vm1152 = vcmask 519616
        %1153 = vst.msk [vmem:[#allocation2] sm:$0xf] %vm1152, %v1147
        %1154 = vst.msk [vmem:[#allocation2 + $0x4] sm:$0xf] %vm1152, %v1149
        %v1155 = vunpack.c.l.b16 %v363
        %v1156 = vunpack.c.l.b16 %v364
        %v1157 = vpack.c.b16 %v1156, %v1155
        %1158 = vrot.lane.b32.xlu0 %v1157, 64
        %v1159 = vpop.permute.xlu0 %1158
        %v1161 = vsel %vm462, %v1157, 0
        %v1164 = vsel %vm462, %v1159, 0
        %1166 = vmatpush.bf16.xpose.msra.mxu0 0
        %1167 = vmatpush.bf16.xpose.msra.mxu0 0
        %1168 = vmatpush.bf16.xpose.msra.mxu0 0
        %1169 = vmatpush.bf16.xpose.msra.mxu0 0
        %1170 = vmatpush.bf16.xpose.msra.mxu0 0
        %1171 = vmatpush.bf16.xpose.msra.mxu0 0
        %1172 = vmatpush.bf16.xpose.msra.mxu0 0
        %1173 = vmatpush.bf16.xpose.msra.mxu0 %v1164
        %1174 = vmatmul.bf16.gmra.mxu0 %v1161
        %v1175 = vpop.f32.mrf.mxu0
        %v1176 = vadd.f32 0.0, %v1175
        %v1177 = vpop.f32.mrf.mxu0
        %v1178 = vadd.f32 0.0, %v1177
        %1179 = vdwg.mxu0
        %v1180 = vunpack.c.l.b16 %v374
        %v1181 = vunpack.c.l.b16 %v376
        %v1182 = vpack.c.b16 %v1181, %v1180
        %1183 = vrot.lane.b32.xlu0 %v1182, 64
        %v1184 = vpop.permute.xlu0 %1183
        %v1186 = vsel %vm462, %v1182, 0
        %v1189 = vsel %vm462, %v1184, 0
        %1191 = vmatpush.bf16.xpose.msra.mxu0 0
        %1192 = vmatpush.bf16.xpose.msra.mxu0 0
        %1193 = vmatpush.bf16.xpose.msra.mxu0 0
        %1194 = vmatpush.bf16.xpose.msra.mxu0 0
        %1195 = vmatpush.bf16.xpose.msra.mxu0 0
        %1196 = vmatpush.bf16.xpose.msra.mxu0 0
        %1197 = vmatpush.bf16.xpose.msra.mxu0 0
        %1198 = vmatpush.bf16.xpose.msra.mxu0 %v1189
        %1199 = vmatmul.bf16.gmra.mxu0 %v1186
        %v1200 = vpop.f32.mrf.mxu0
        %v1201 = vadd.f32 0.0, %v1200
        %v1202 = vpop.f32.mrf.mxu0
        %v1203 = vadd.f32 0.0, %v1202
        %1204 = vdwg.mxu0
        %v1205 = vunpack.c.l.b16 %v382
        %v1206 = vunpack.c.l.b16 %v384
        %v1207 = vpack.c.b16 %v1206, %v1205
        %1208 = vrot.lane.b32.xlu0 %v1207, 64
        %v1209 = vpop.permute.xlu0 %1208
        %v1211 = vsel %vm462, %v1207, 0
        %v1214 = vsel %vm462, %v1209, 0
        %1216 = vmatpush.bf16.xpose.msra.mxu0 0
        %1217 = vmatpush.bf16.xpose.msra.mxu0 0
        %1218 = vmatpush.bf16.xpose.msra.mxu0 0
        %1219 = vmatpush.bf16.xpose.msra.mxu0 0
        %1220 = vmatpush.bf16.xpose.msra.mxu0 0
        %1221 = vmatpush.bf16.xpose.msra.mxu0 0
        %1222 = vmatpush.bf16.xpose.msra.mxu0 0
        %1223 = vmatpush.bf16.xpose.msra.mxu0 %v1214
        %1224 = vmatmul.bf16.gmra.mxu0 %v1211
        %v1225 = vpop.f32.mrf.mxu0
        %v1226 = vadd.f32 0.0, %v1225
        %v1227 = vpop.f32.mrf.mxu0
        %v1228 = vadd.f32 0.0, %v1227
        %1229 = vdwg.mxu0
        %v1230 = vunpack.c.l.b16 %v390
        %v1231 = vunpack.c.l.b16 %v392
        %v1232 = vpack.c.b16 %v1231, %v1230
        %1233 = vrot.lane.b32.xlu0 %v1232, 64
        %v1234 = vpop.permute.xlu0 %1233
        %v1236 = vsel %vm462, %v1232, 0
        %v1239 = vsel %vm462, %v1234, 0
        %1241 = vmatpush.bf16.xpose.msra.mxu0 0
        %1242 = vmatpush.bf16.xpose.msra.mxu0 0
        %1243 = vmatpush.bf16.xpose.msra.mxu0 0
        %1244 = vmatpush.bf16.xpose.msra.mxu0 0
        %1245 = vmatpush.bf16.xpose.msra.mxu0 0
        %1246 = vmatpush.bf16.xpose.msra.mxu0 0
        %1247 = vmatpush.bf16.xpose.msra.mxu0 0
        %1248 = vmatpush.bf16.xpose.msra.mxu0 %v1239
        %1249 = vmatmul.bf16.gmra.mxu0 %v1236
        %v1250 = vpop.f32.mrf.mxu0
        %v1251 = vadd.f32 0.0, %v1250
        %v1252 = vpop.f32.mrf.mxu0
        %v1253 = vadd.f32 0.0, %v1252
        %1254 = vdwg.mxu0
        %v1255 = vunpack.c.l.b16 %v398
        %v1256 = vunpack.c.l.b16 %v400
        %v1257 = vpack.c.b16 %v1256, %v1255
        %1258 = vrot.lane.b32.xlu0 %v1257, 64
        %v1259 = vpop.permute.xlu0 %1258
        %v1261 = vsel %vm462, %v1257, 0
        %v1264 = vsel %vm462, %v1259, 0
        %1266 = vmatpush.bf16.xpose.msra.mxu0 0
        %1267 = vmatpush.bf16.xpose.msra.mxu0 0
        %1268 = vmatpush.bf16.xpose.msra.mxu0 0
        %1269 = vmatpush.bf16.xpose.msra.mxu0 0
        %1270 = vmatpush.bf16.xpose.msra.mxu0 0
        %1271 = vmatpush.bf16.xpose.msra.mxu0 0
        %1272 = vmatpush.bf16.xpose.msra.mxu0 0
        %1273 = vmatpush.bf16.xpose.msra.mxu0 %v1264
        %1274 = vmatmul.bf16.gmra.mxu0 %v1261
        %v1275 = vpop.f32.mrf.mxu0
        %v1276 = vadd.f32 0.0, %v1275
        %v1277 = vpop.f32.mrf.mxu0
        %v1278 = vadd.f32 0.0, %v1277
        %1279 = vdwg.mxu0
        %v1280 = vunpack.c.l.b16 %v406
        %v1281 = vunpack.c.l.b16 %v408
        %v1282 = vpack.c.b16 %v1281, %v1280
        %1283 = vrot.lane.b32.xlu0 %v1282, 64
        %v1284 = vpop.permute.xlu0 %1283
        %v1286 = vsel %vm462, %v1282, 0
        %v1289 = vsel %vm462, %v1284, 0
        %1291 = vmatpush.bf16.xpose.msra.mxu0 0
        %1292 = vmatpush.bf16.xpose.msra.mxu0 0
        %1293 = vmatpush.bf16.xpose.msra.mxu0 0
        %1294 = vmatpush.bf16.xpose.msra.mxu0 0
        %1295 = vmatpush.bf16.xpose.msra.mxu0 0
        %1296 = vmatpush.bf16.xpose.msra.mxu0 0
        %1297 = vmatpush.bf16.xpose.msra.mxu0 0
        %1298 = vmatpush.bf16.xpose.msra.mxu0 %v1289
        %1299 = vmatmul.bf16.gmra.mxu0 %v1286
        %v1300 = vpop.f32.mrf.mxu0
        %v1301 = vadd.f32 0.0, %v1300
        %v1302 = vpop.f32.mrf.mxu0
        %v1303 = vadd.f32 0.0, %v1302
        %1304 = vdwg.mxu0
        %v1305 = vunpack.c.l.b16 %v414
        %v1306 = vunpack.c.l.b16 %v416
        %v1307 = vpack.c.b16 %v1306, %v1305
        %1308 = vrot.lane.b32.xlu0 %v1307, 64
        %v1309 = vpop.permute.xlu0 %1308
        %v1311 = vsel %vm462, %v1307, 0
        %v1314 = vsel %vm462, %v1309, 0
        %1316 = vmatpush.bf16.xpose.msra.mxu0 0
        %1317 = vmatpush.bf16.xpose.msra.mxu0 0
        %1318 = vmatpush.bf16.xpose.msra.mxu0 0
        %1319 = vmatpush.bf16.xpose.msra.mxu0 0
        %1320 = vmatpush.bf16.xpose.msra.mxu0 0
        %1321 = vmatpush.bf16.xpose.msra.mxu0 0
        %1322 = vmatpush.bf16.xpose.msra.mxu0 0
        %1323 = vmatpush.bf16.xpose.msra.mxu0 %v1314
        %1324 = vmatmul.bf16.gmra.mxu0 %v1311
        %v1325 = vpop.f32.mrf.mxu0
        %v1326 = vadd.f32 0.0, %v1325
        %v1327 = vpop.f32.mrf.mxu0
        %v1328 = vadd.f32 0.0, %v1327
        %1329 = vdwg.mxu0
        %v1330 = vunpack.c.l.b16 %v422
        %v1331 = vunpack.c.l.b16 %v424
        %v1332 = vpack.c.b16 %v1331, %v1330
        %1333 = vrot.lane.b32.xlu0 %v1332, 64
        %v1334 = vpop.permute.xlu0 %1333
        %v1336 = vsel %vm462, %v1332, 0
        %v1339 = vsel %vm462, %v1334, 0
        %1341 = vmatpush.bf16.xpose.msra.mxu0 0
        %1342 = vmatpush.bf16.xpose.msra.mxu0 0
        %1343 = vmatpush.bf16.xpose.msra.mxu0 0
        %1344 = vmatpush.bf16.xpose.msra.mxu0 0
        %1345 = vmatpush.bf16.xpose.msra.mxu0 0
        %1346 = vmatpush.bf16.xpose.msra.mxu0 0
        %1347 = vmatpush.bf16.xpose.msra.mxu0 0
        %1348 = vmatpush.bf16.xpose.msra.mxu0 %v1339
        %1349 = vmatmul.bf16.gmra.mxu0 %v1336
        %v1350 = vpop.f32.mrf.mxu0
        %v1351 = vadd.f32 0.0, %v1350
        %v1352 = vpop.f32.mrf.mxu0
        %v1353 = vadd.f32 0.0, %v1352
        %1354 = vdwg.mxu0
        %v1355 = vsel %vm658, %v1176, -inf
        %1356 = vmax.xlane.f32.xlu0 %v1355
        %v1357 = vpop.xlane.xlu0 %1356
        %v1358 = vsel %vm658, %v1178, -inf
        %1359 = vmax.xlane.f32.xlu0 %v1358
        %v1360 = vpop.xlane.xlu0 %1359
        %v1361 = vsel %vm658, %v1201, -inf
        %1362 = vmax.xlane.f32.xlu0 %v1361
        %v1363 = vpop.xlane.xlu0 %1362
        %v1364 = vsel %vm658, %v1203, -inf
        %1365 = vmax.xlane.f32.xlu0 %v1364
        %v1366 = vpop.xlane.xlu0 %1365
        %v1367 = vsel %vm658, %v1226, -inf
        %1368 = vmax.xlane.f32.xlu0 %v1367
        %v1369 = vpop.xlane.xlu0 %1368
        %v1370 = vsel %vm658, %v1228, -inf
        %1371 = vmax.xlane.f32.xlu0 %v1370
        %v1372 = vpop.xlane.xlu0 %1371
        %v1373 = vsel %vm658, %v1251, -inf
        %1374 = vmax.xlane.f32.xlu0 %v1373
        %v1375 = vpop.xlane.xlu0 %1374
        %v1376 = vsel %vm658, %v1253, -inf
        %1377 = vmax.xlane.f32.xlu0 %v1376
        %v1378 = vpop.xlane.xlu0 %1377
        %v1379 = vsel %vm658, %v1276, -inf
        %1380 = vmax.xlane.f32.xlu0 %v1379
        %v1381 = vpop.xlane.xlu0 %1380
        %v1382 = vsel %vm658, %v1278, -inf
        %1383 = vmax.xlane.f32.xlu0 %v1382
        %v1384 = vpop.xlane.xlu0 %1383
        %v1385 = vsel %vm658, %v1301, -inf
        %1386 = vmax.xlane.f32.xlu0 %v1385
        %v1387 = vpop.xlane.xlu0 %1386
        %v1388 = vsel %vm658, %v1303, -inf
        %1389 = vmax.xlane.f32.xlu0 %v1388
        %v1390 = vpop.xlane.xlu0 %1389
        %v1391 = vsel %vm658, %v1326, -inf
        %1392 = vmax.xlane.f32.xlu0 %v1391
        %v1393 = vpop.xlane.xlu0 %1392
        %v1394 = vsel %vm658, %v1328, -inf
        %1395 = vmax.xlane.f32.xlu0 %v1394
        %v1396 = vpop.xlane.xlu0 %1395
        %v1397 = vsel %vm658, %v1351, -inf
        %1398 = vmax.xlane.f32.xlu0 %v1397
        %v1399 = vpop.xlane.xlu0 %1398
        %v1400 = vsel %vm658, %v1353, -inf
        %1401 = vmax.xlane.f32.xlu0 %v1400
        %v1402 = vpop.xlane.xlu0 %1401
        %v1403 = vsub.f32 %v1176, %v1357
        %v1404 = vsub.f32 %v1178, %v1360
        %v1405 = vsub.f32 %v1201, %v1363
        %v1406 = vsub.f32 %v1203, %v1366
        %v1407 = vsub.f32 %v1226, %v1369
        %v1408 = vsub.f32 %v1228, %v1372
        %v1409 = vsub.f32 %v1251, %v1375
        %v1410 = vsub.f32 %v1253, %v1378
        %v1411 = vsub.f32 %v1276, %v1381
        %v1412 = vsub.f32 %v1278, %v1384
        %v1413 = vsub.f32 %v1301, %v1387
        %v1414 = vsub.f32 %v1303, %v1390
        %v1415 = vsub.f32 %v1326, %v1393
        %v1416 = vsub.f32 %v1328, %v1396
        %v1417 = vsub.f32 %v1351, %v1399
        %v1418 = vsub.f32 %v1353, %v1402
        %v1419 = vmul.f32 %v1403, 1.442695
        %v1420 = vpow.pop %v1419
        %v1421 = vmul.f32 %v1404, 1.442695
        %v1422 = vpow.pop %v1421
        %v1423 = vmul.f32 %v1405, 1.442695
        %v1424 = vpow.pop %v1423
        %v1425 = vmul.f32 %v1406, 1.442695
        %v1426 = vpow.pop %v1425
        %v1427 = vmul.f32 %v1407, 1.442695
        %v1428 = vpow.pop %v1427
        %v1429 = vmul.f32 %v1408, 1.442695
        %v1430 = vpow.pop %v1429
        %v1431 = vmul.f32 %v1409, 1.442695
        %v1432 = vpow.pop %v1431
        %v1433 = vmul.f32 %v1410, 1.442695
        %v1434 = vpow.pop %v1433
        %v1435 = vmul.f32 %v1411, 1.442695
        %v1436 = vpow.pop %v1435
        %v1437 = vmul.f32 %v1412, 1.442695
        %v1438 = vpow.pop %v1437
        %v1439 = vmul.f32 %v1413, 1.442695
        %v1440 = vpow.pop %v1439
        %v1441 = vmul.f32 %v1414, 1.442695
        %v1442 = vpow.pop %v1441
        %v1443 = vmul.f32 %v1415, 1.442695
        %v1444 = vpow.pop %v1443
        %v1445 = vmul.f32 %v1416, 1.442695
        %v1446 = vpow.pop %v1445
        %v1447 = vmul.f32 %v1417, 1.442695
        %v1448 = vpow.pop %v1447
        %v1449 = vmul.f32 %v1418, 1.442695
        %v1450 = vpow.pop %v1449
        %v1451 = vsel %vm658, %v1420, 0.0
        %1452 = vadd.xlane.f32.xlu0 %v1451
        %v1453 = vpop.xlane.xlu0 %1452
        %v1454 = vsel %vm658, %v1422, 0.0
        %1455 = vadd.xlane.f32.xlu0 %v1454
        %v1456 = vpop.xlane.xlu0 %1455
        %v1457 = vsel %vm658, %v1424, 0.0
        %1458 = vadd.xlane.f32.xlu0 %v1457
        %v1459 = vpop.xlane.xlu0 %1458
        %v1460 = vsel %vm658, %v1426, 0.0
        %1461 = vadd.xlane.f32.xlu0 %v1460
        %v1462 = vpop.xlane.xlu0 %1461
        %v1463 = vsel %vm658, %v1428, 0.0
        %1464 = vadd.xlane.f32.xlu0 %v1463
        %v1465 = vpop.xlane.xlu0 %1464
        %v1466 = vsel %vm658, %v1430, 0.0
        %1467 = vadd.xlane.f32.xlu0 %v1466
        %v1468 = vpop.xlane.xlu0 %1467
        %v1469 = vsel %vm658, %v1432, 0.0
        %1470 = vadd.xlane.f32.xlu0 %v1469
        %v1471 = vpop.xlane.xlu0 %1470
        %v1472 = vsel %vm658, %v1434, 0.0
        %1473 = vadd.xlane.f32.xlu0 %v1472
        %v1474 = vpop.xlane.xlu0 %1473
        %v1475 = vsel %vm658, %v1436, 0.0
        %1476 = vadd.xlane.f32.xlu0 %v1475
        %v1477 = vpop.xlane.xlu0 %1476
        %v1478 = vsel %vm658, %v1438, 0.0
        %1479 = vadd.xlane.f32.xlu0 %v1478
        %v1480 = vpop.xlane.xlu0 %1479
        %v1481 = vsel %vm658, %v1440, 0.0
        %1482 = vadd.xlane.f32.xlu0 %v1481
        %v1483 = vpop.xlane.xlu0 %1482
        %v1484 = vsel %vm658, %v1442, 0.0
        %1485 = vadd.xlane.f32.xlu0 %v1484
        %v1486 = vpop.xlane.xlu0 %1485
        %v1487 = vsel %vm658, %v1444, 0.0
        %1488 = vadd.xlane.f32.xlu0 %v1487
        %v1489 = vpop.xlane.xlu0 %1488
        %v1490 = vsel %vm658, %v1446, 0.0
        %1491 = vadd.xlane.f32.xlu0 %v1490
        %v1492 = vpop.xlane.xlu0 %1491
        %v1493 = vsel %vm658, %v1448, 0.0
        %1494 = vadd.xlane.f32.xlu0 %v1493
        %v1495 = vpop.xlane.xlu0 %1494
        %v1496 = vsel %vm658, %v1450, 0.0
        %1497 = vadd.xlane.f32.xlu0 %v1496
        %v1498 = vpop.xlane.xlu0 %1497
        %v1499 = vrcp.pop %v1453
        %v1500 = vrcp.pop %v1456
        %v1501 = vrcp.pop %v1459
        %v1502 = vrcp.pop %v1462
        %v1503 = vrcp.pop %v1465
        %v1504 = vrcp.pop %v1468
        %v1505 = vrcp.pop %v1471
        %v1506 = vrcp.pop %v1474
        %v1507 = vrcp.pop %v1477
        %v1508 = vrcp.pop %v1480
        %v1509 = vrcp.pop %v1483
        %v1510 = vrcp.pop %v1486
        %v1511 = vrcp.pop %v1489
        %v1512 = vrcp.pop %v1492
        %v1513 = vrcp.pop %v1495
        %v1514 = vrcp.pop %v1498
        %v1515 = vmul.f32 %v1420, %v1499
        %v1516 = vmul.f32 %v1422, %v1500
        %v1517 = vmul.f32 %v1424, %v1501
        %v1518 = vmul.f32 %v1426, %v1502
        %v1519 = vmul.f32 %v1428, %v1503
        %v1520 = vmul.f32 %v1430, %v1504
        %v1521 = vmul.f32 %v1432, %v1505
        %v1522 = vmul.f32 %v1434, %v1506
        %v1523 = vmul.f32 %v1436, %v1507
        %v1524 = vmul.f32 %v1438, %v1508
        %v1525 = vmul.f32 %v1440, %v1509
        %v1526 = vmul.f32 %v1442, %v1510
        %v1527 = vmul.f32 %v1444, %v1511
        %v1528 = vmul.f32 %v1446, %v1512
        %v1529 = vmul.f32 %v1448, %v1513
        %v1530 = vmul.f32 %v1450, %v1514
        %v1531 = vpack.c.bf16 %v1515, %v1515
        %v1532 = vpack.c.bf16 %v1516, %v1516
        %v1533 = vpack.c.bf16 %v1517, %v1517
        %v1534 = vpack.c.bf16 %v1518, %v1518
        %v1535 = vpack.c.bf16 %v1519, %v1519
        %v1536 = vpack.c.bf16 %v1520, %v1520
        %v1537 = vpack.c.bf16 %v1521, %v1521
        %v1538 = vpack.c.bf16 %v1522, %v1522
        %v1539 = vpack.c.bf16 %v1523, %v1523
        %v1540 = vpack.c.bf16 %v1524, %v1524
        %v1541 = vpack.c.bf16 %v1525, %v1525
        %v1542 = vpack.c.bf16 %v1526, %v1526
        %v1543 = vpack.c.bf16 %v1527, %v1527
        %v1544 = vpack.c.bf16 %v1528, %v1528
        %v1545 = vpack.c.bf16 %v1529, %v1529
        %v1546 = vpack.c.bf16 %v1530, %v1530
        %v1549 = vunpack.c.l.b16 %v1531
        %v1550 = vunpack.c.l.b16 %v1532
        %v1551 = vpack.c.b16 %v1550, %v1549
        %v1552 = vunpack.c.l.b16 %v427
        %v1553 = vunpack.c.l.b16 %v428
        %v1554 = vpack.c.b16 %v1553, %v1552
        %v1557 = vsel %vm658, %v1551, 0
        %1559 = vmatpush.bf16.msra.mxu0 0
        %1560 = vmatpush.bf16.msra.mxu0 0
        %1561 = vmatpush.bf16.msra.mxu0 0
        %1562 = vmatpush.bf16.msra.mxu0 0
        %1563 = vmatpush.bf16.msra.mxu0 0
        %1564 = vmatpush.bf16.msra.mxu0 0
        %1565 = vmatpush.bf16.msra.mxu0 0
        %1566 = vmatpush.bf16.msra.mxu0 %v1554
        %1567 = vmatmul.bf16.gmra.mxu0 %v1557
        %v1568 = vpop.f32.mrf.mxu0
        %v1569 = vadd.f32 0.0, %v1568
        %v1570 = vpop.f32.mrf.mxu0
        %v1571 = vadd.f32 0.0, %v1570
        %1572 = vdwg.mxu0
        %v1575 = vunpack.c.l.b16 %v1533
        %v1576 = vunpack.c.l.b16 %v1534
        %v1577 = vpack.c.b16 %v1576, %v1575
        %v1578 = vunpack.c.l.b16 %v431
        %v1579 = vunpack.c.l.b16 %v432
        %v1580 = vpack.c.b16 %v1579, %v1578
        %v1583 = vsel %vm658, %v1577, 0
        %1585 = vmatpush.bf16.msra.mxu0 0
        %1586 = vmatpush.bf16.msra.mxu0 0
        %1587 = vmatpush.bf16.msra.mxu0 0
        %1588 = vmatpush.bf16.msra.mxu0 0
        %1589 = vmatpush.bf16.msra.mxu0 0
        %1590 = vmatpush.bf16.msra.mxu0 0
        %1591 = vmatpush.bf16.msra.mxu0 0
        %1592 = vmatpush.bf16.msra.mxu0 %v1580
        %1593 = vmatmul.bf16.gmra.mxu0 %v1583
        %v1594 = vpop.f32.mrf.mxu0
        %v1595 = vadd.f32 0.0, %v1594
        %v1596 = vpop.f32.mrf.mxu0
        %v1597 = vadd.f32 0.0, %v1596
        %1598 = vdwg.mxu0
        %v1601 = vunpack.c.l.b16 %v1535
        %v1602 = vunpack.c.l.b16 %v1536
        %v1603 = vpack.c.b16 %v1602, %v1601
        %v1604 = vunpack.c.l.b16 %v435
        %v1605 = vunpack.c.l.b16 %v436
        %v1606 = vpack.c.b16 %v1605, %v1604
        %v1609 = vsel %vm658, %v1603, 0
        %1611 = vmatpush.bf16.msra.mxu0 0
        %1612 = vmatpush.bf16.msra.mxu0 0
        %1613 = vmatpush.bf16.msra.mxu0 0
        %1614 = vmatpush.bf16.msra.mxu0 0
        %1615 = vmatpush.bf16.msra.mxu0 0
        %1616 = vmatpush.bf16.msra.mxu0 0
        %1617 = vmatpush.bf16.msra.mxu0 0
        %1618 = vmatpush.bf16.msra.mxu0 %v1606
        %1619 = vmatmul.bf16.gmra.mxu0 %v1609
        %v1620 = vpop.f32.mrf.mxu0
        %v1621 = vadd.f32 0.0, %v1620
        %v1622 = vpop.f32.mrf.mxu0
        %v1623 = vadd.f32 0.0, %v1622
        %1624 = vdwg.mxu0
        %v1627 = vunpack.c.l.b16 %v1537
        %v1628 = vunpack.c.l.b16 %v1538
        %v1629 = vpack.c.b16 %v1628, %v1627
        %v1630 = vunpack.c.l.b16 %v439
        %v1631 = vunpack.c.l.b16 %v440
        %v1632 = vpack.c.b16 %v1631, %v1630
        %v1635 = vsel %vm658, %v1629, 0
        %1637 = vmatpush.bf16.msra.mxu0 0
        %1638 = vmatpush.bf16.msra.mxu0 0
        %1639 = vmatpush.bf16.msra.mxu0 0
        %1640 = vmatpush.bf16.msra.mxu0 0
        %1641 = vmatpush.bf16.msra.mxu0 0
        %1642 = vmatpush.bf16.msra.mxu0 0
        %1643 = vmatpush.bf16.msra.mxu0 0
        %1644 = vmatpush.bf16.msra.mxu0 %v1632
        %1645 = vmatmul.bf16.gmra.mxu0 %v1635
        %v1646 = vpop.f32.mrf.mxu0
        %v1647 = vadd.f32 0.0, %v1646
        %v1648 = vpop.f32.mrf.mxu0
        %v1649 = vadd.f32 0.0, %v1648
        %1650 = vdwg.mxu0
        %v1653 = vunpack.c.l.b16 %v1539
        %v1654 = vunpack.c.l.b16 %v1540
        %v1655 = vpack.c.b16 %v1654, %v1653
        %v1656 = vunpack.c.l.b16 %v443
        %v1657 = vunpack.c.l.b16 %v444
        %v1658 = vpack.c.b16 %v1657, %v1656
        %v1661 = vsel %vm658, %v1655, 0
        %1663 = vmatpush.bf16.msra.mxu0 0
        %1664 = vmatpush.bf16.msra.mxu0 0
        %1665 = vmatpush.bf16.msra.mxu0 0
        %1666 = vmatpush.bf16.msra.mxu0 0
        %1667 = vmatpush.bf16.msra.mxu0 0
        %1668 = vmatpush.bf16.msra.mxu0 0
        %1669 = vmatpush.bf16.msra.mxu0 0
        %1670 = vmatpush.bf16.msra.mxu0 %v1658
        %1671 = vmatmul.bf16.gmra.mxu0 %v1661
        %v1672 = vpop.f32.mrf.mxu0
        %v1673 = vadd.f32 0.0, %v1672
        %v1674 = vpop.f32.mrf.mxu0
        %v1675 = vadd.f32 0.0, %v1674
        %1676 = vdwg.mxu0
        %v1679 = vunpack.c.l.b16 %v1541
        %v1680 = vunpack.c.l.b16 %v1542
        %v1681 = vpack.c.b16 %v1680, %v1679
        %v1682 = vunpack.c.l.b16 %v447
        %v1683 = vunpack.c.l.b16 %v448
        %v1684 = vpack.c.b16 %v1683, %v1682
        %v1687 = vsel %vm658, %v1681, 0
        %1689 = vmatpush.bf16.msra.mxu0 0
        %1690 = vmatpush.bf16.msra.mxu0 0
        %1691 = vmatpush.bf16.msra.mxu0 0
        %1692 = vmatpush.bf16.msra.mxu0 0
        %1693 = vmatpush.bf16.msra.mxu0 0
        %1694 = vmatpush.bf16.msra.mxu0 0
        %1695 = vmatpush.bf16.msra.mxu0 0
        %1696 = vmatpush.bf16.msra.mxu0 %v1684
        %1697 = vmatmul.bf16.gmra.mxu0 %v1687
        %v1698 = vpop.f32.mrf.mxu0
        %v1699 = vadd.f32 0.0, %v1698
        %v1700 = vpop.f32.mrf.mxu0
        %v1701 = vadd.f32 0.0, %v1700
        %1702 = vdwg.mxu0
        %v1705 = vunpack.c.l.b16 %v1543
        %v1706 = vunpack.c.l.b16 %v1544
        %v1707 = vpack.c.b16 %v1706, %v1705
        %v1708 = vunpack.c.l.b16 %v451
        %v1709 = vunpack.c.l.b16 %v452
        %v1710 = vpack.c.b16 %v1709, %v1708
        %v1713 = vsel %vm658, %v1707, 0
        %1715 = vmatpush.bf16.msra.mxu0 0
        %1716 = vmatpush.bf16.msra.mxu0 0
        %1717 = vmatpush.bf16.msra.mxu0 0
        %1718 = vmatpush.bf16.msra.mxu0 0
        %1719 = vmatpush.bf16.msra.mxu0 0
        %1720 = vmatpush.bf16.msra.mxu0 0
        %1721 = vmatpush.bf16.msra.mxu0 0
        %1722 = vmatpush.bf16.msra.mxu0 %v1710
        %1723 = vmatmul.bf16.gmra.mxu0 %v1713
        %v1724 = vpop.f32.mrf.mxu0
        %v1725 = vadd.f32 0.0, %v1724
        %v1726 = vpop.f32.mrf.mxu0
        %v1727 = vadd.f32 0.0, %v1726
        %1728 = vdwg.mxu0
        %v1731 = vunpack.c.l.b16 %v1545
        %v1732 = vunpack.c.l.b16 %v1546
        %v1733 = vpack.c.b16 %v1732, %v1731
        %v1734 = vunpack.c.l.b16 %v455
        %v1735 = vunpack.c.l.b16 %v456
        %v1736 = vpack.c.b16 %v1735, %v1734
        %v1739 = vsel %vm658, %v1733, 0
        %1741 = vmatpush.bf16.msra.mxu0 0
        %1742 = vmatpush.bf16.msra.mxu0 0
        %1743 = vmatpush.bf16.msra.mxu0 0
        %1744 = vmatpush.bf16.msra.mxu0 0
        %1745 = vmatpush.bf16.msra.mxu0 0
        %1746 = vmatpush.bf16.msra.mxu0 0
        %1747 = vmatpush.bf16.msra.mxu0 0
        %1748 = vmatpush.bf16.msra.mxu0 %v1736
        %1749 = vmatmul.bf16.gmra.mxu0 %v1739
        %v1750 = vpop.f32.mrf.mxu0
        %v1751 = vadd.f32 0.0, %v1750
        %v1752 = vpop.f32.mrf.mxu0
        %v1753 = vadd.f32 0.0, %v1752
        %1754 = vdwg.mxu0
        %v1755 = vpack.c.bf16 %v1569, %v1569
        %v1756 = vpack.c.bf16 %v1571, %v1571
        %v1757 = vpack.c.bf16 %v1595, %v1595
        %v1758 = vpack.c.bf16 %v1597, %v1597
        %v1759 = vpack.c.bf16 %v1621, %v1621
        %v1760 = vpack.c.bf16 %v1623, %v1623
        %v1761 = vpack.c.bf16 %v1647, %v1647
        %v1762 = vpack.c.bf16 %v1649, %v1649
        %v1763 = vpack.c.bf16 %v1673, %v1673
        %v1764 = vpack.c.bf16 %v1675, %v1675
        %v1765 = vpack.c.bf16 %v1699, %v1699
        %v1766 = vpack.c.bf16 %v1701, %v1701
        %v1767 = vpack.c.bf16 %v1725, %v1725
        %v1768 = vpack.c.bf16 %v1727, %v1727
        %v1769 = vpack.c.bf16 %v1751, %v1751
        %v1770 = vpack.c.bf16 %v1753, %v1753
        %1771 = vst.msk [vmem:[#allocation2 + $0x8] sm:$0xf] %vm1075, %v1755
        %1772 = vst.msk [vmem:[#allocation2 + $0xc] sm:$0xf] %vm1075, %v1756
        %1775 = vrot.lane.b32.xlu0 %v1757, 8
        %v1776 = vpop.permute.xlu0 %1775
        %1777 = vrot.lane.b32.xlu0 %v1758, 8
        %v1778 = vpop.permute.xlu0 %1777
        %1781 = vst.msk [vmem:[#allocation2 + $0x8] sm:$0xf] %vm1086, %v1776
        %1782 = vst.msk [vmem:[#allocation2 + $0xc] sm:$0xf] %vm1086, %v1778
        %1785 = vrot.lane.b32.xlu0 %v1759, 16
        %v1786 = vpop.permute.xlu0 %1785
        %1787 = vrot.lane.b32.xlu0 %v1760, 16
        %v1788 = vpop.permute.xlu0 %1787
        %1791 = vst.msk [vmem:[#allocation2 + $0x8] sm:$0xf] %vm1097, %v1786
        %1792 = vst.msk [vmem:[#allocation2 + $0xc] sm:$0xf] %vm1097, %v1788
        %1795 = vrot.lane.b32.xlu0 %v1761, 24
        %v1796 = vpop.permute.xlu0 %1795
        %1797 = vrot.lane.b32.xlu0 %v1762, 24
        %v1798 = vpop.permute.xlu0 %1797
        %1801 = vst.msk [vmem:[#allocation2 + $0x8] sm:$0xf] %vm1108, %v1796
        %1802 = vst.msk [vmem:[#allocation2 + $0xc] sm:$0xf] %vm1108, %v1798
        %1805 = vrot.lane.b32.xlu0 %v1763, 32
        %v1806 = vpop.permute.xlu0 %1805
        %1807 = vrot.lane.b32.xlu0 %v1764, 32
        %v1808 = vpop.permute.xlu0 %1807
        %1811 = vst.msk [vmem:[#allocation2 + $0x8] sm:$0xf] %vm1119, %v1806
        %1812 = vst.msk [vmem:[#allocation2 + $0xc] sm:$0xf] %vm1119, %v1808
        %1815 = vrot.lane.b32.xlu0 %v1765, 40
        %v1816 = vpop.permute.xlu0 %1815
        %1817 = vrot.lane.b32.xlu0 %v1766, 40
        %v1818 = vpop.permute.xlu0 %1817
        %1821 = vst.msk [vmem:[#allocation2 + $0x8] sm:$0xf] %vm1130, %v1816
        %1822 = vst.msk [vmem:[#allocation2 + $0xc] sm:$0xf] %vm1130, %v1818
        %1825 = vrot.lane.b32.xlu0 %v1767, 48
        %v1826 = vpop.permute.xlu0 %1825
        %1827 = vrot.lane.b32.xlu0 %v1768, 48
        %v1828 = vpop.permute.xlu0 %1827
        %1831 = vst.msk [vmem:[#allocation2 + $0x8] sm:$0xf] %vm1141, %v1826
        %1832 = vst.msk [vmem:[#allocation2 + $0xc] sm:$0xf] %vm1141, %v1828
        %1835 = vrot.lane.b32.xlu0 %v1769, 56
        %v1836 = vpop.permute.xlu0 %1835
        %1837 = vrot.lane.b32.xlu0 %v1770, 56
        %v1838 = vpop.permute.xlu0 %1837
        %1841 = vst.msk [vmem:[#allocation2 + $0x8] sm:$0xf] %vm1152, %v1836
        %1842 = vst.msk [vmem:[#allocation2 + $0xc] sm:$0xf] %vm1152, %v1838
        %v1843 = vld [vmem:[#allocation2] sm:$0xf]
        %v1844 = vld [vmem:[#allocation2 + $0x4] sm:$0xf]
        %v1845 = vld [vmem:[#allocation2 + $0x8] sm:$0xf]
        %v1846 = vld [vmem:[#allocation2 + $0xc] sm:$0xf]
        %v1847 = vld [vmem:[#allocation8] sm:$0xf]
        %v1848 = vld [vmem:[#allocation8 + $0x4] sm:$0xf]
        %v1849 = vld [vmem:[#allocation8 + $0x8] sm:$0xf]
        %v1850 = vld [vmem:[#allocation8 + $0xc] sm:$0xf]
        %v1851 = vld [vmem:[#allocation8 + $0x10] sm:$0xf]
        %v1852 = vld [vmem:[#allocation8 + $0x14] sm:$0xf]
        %v1853 = vld [vmem:[#allocation8 + $0x18] sm:$0xf]
        %v1854 = vld [vmem:[#allocation8 + $0x1c] sm:$0xf]
        %v1855 = vld [vmem:[%s3] sm:$0x1]
        %v1857 = vperm.slane %v1855, 0
        %v1863 = vunpack.c.l.b16 %v1843
        %v1864 = vunpack.c.l.b16 %v1844
        %v1865 = vunpack.c.l.b16 %v1845
        %v1866 = vunpack.c.l.b16 %v1846
        %v1867 = vpack.c.b16 %v1864, %v1863
        %v1868 = vpack.c.b16 %v1866, %v1865
        %v1877 = vunpack.c.l.b16 %v1847
        %v1878 = vunpack.c.l.b16 %v1848
        %v1879 = vunpack.c.l.b16 %v1849
        %v1880 = vunpack.c.l.b16 %v1850
        %v1881 = vunpack.c.l.b16 %v1851
        %v1882 = vunpack.c.l.b16 %v1852
        %v1883 = vunpack.c.l.b16 %v1853
        %v1884 = vunpack.c.l.b16 %v1854
        %v1885 = vpack.c.b16 %v1878, %v1877
        %v1886 = vpack.c.b16 %v1880, %v1879
        %v1887 = vpack.c.b16 %v1882, %v1881
        %v1888 = vpack.c.b16 %v1884, %v1883
        %v1894 = vsel %vm316, %v1867, 0
        %v1897 = vsel %vm316, %v1868, 0
        %1899 = vmatpush.bf16.msra.mxu0 0
        %1900 = vmatpush.bf16.msra.mxu0 0
        %1901 = vmatpush.bf16.msra.mxu0 0
        %1902 = vmatpush.bf16.msra.mxu0 0
        %1903 = vmatpush.bf16.msra.mxu0 %v1888
        %1904 = vmatpush.bf16.msra.mxu0 %v1887
        %1905 = vmatpush.bf16.msra.mxu0 %v1886
        %1906 = vmatpush.bf16.msra.mxu0 %v1885
        %1907 = vmatmul.bf16.gmra.mxu0 %v1894
        %v1908 = vpop.f32.mrf.mxu0
        %v1909 = vadd.f32 %v1857, %v1908
        %v1910 = vpop.f32.mrf.mxu0
        %v1911 = vadd.f32 %v1857, %v1910
        %1912 = vmatmul.bf16.gmra.mxu0 %v1897
        %v1913 = vpop.f32.mrf.mxu0
        %v1914 = vadd.f32 %v1857, %v1913
        %v1915 = vpop.f32.mrf.mxu0
        %v1916 = vadd.f32 %v1857, %v1915
        %1917 = vdwg.mxu0
        %v1918 = vpack.c.bf16 %v1909, %v1909
        %v1919 = vpack.c.bf16 %v1911, %v1911
        %v1920 = vpack.c.bf16 %v1914, %v1914
        %v1921 = vpack.c.bf16 %v1916, %v1916
        %vm1922 = vcmask 519168
        %1923 = vst.msk [vmem:[%s250] sm:$0xf] %vm1922, %v1918
        %1924 = vst.msk [vmem:[%s250 + $0x4] sm:$0xf] %vm1922, %v1919
        %1925 = vst.msk [vmem:[%s250 + $0x8] sm:$0xf] %vm1922, %v1920
        %1926 = vst.msk [vmem:[%s250 + $0xc] sm:$0xf] %vm1922, %v1921
        %s1927 = sand.u32 %s119, 1
        %s1928 = scalar_lea.sflag [#allocation5], %s1927
        %s1929 = sand.u32 %s119, 1
        %s1930 = smul.addr %s1929, 16
        %s1931 = scalar_lea.vmem [#allocation9], %s1930
        // Predicated region
        $region49: #{tpu_custom_call.1} parent=35 // pred_check
          %p1932 = pneg %p129
        $region50: #{tpu_custom_call.1} parent=35 // pred_check_branch
          %1934 = sbr.rel (%p1932) target = $region52
        $region51: #{tpu_custom_call.1} parent=35 // pred_region
          %s1935 = smul.u32 4, %s22
          %1937 = vsyncadd %s1928, 0
          %s1938 = smul.addr %s1935, 4
          %s1939 = scalar_lea.hbm %s4, %s1938
          %s1940 = sshll.u32 %s1931, 4
          %s1941 = int_to_ptr.vmem [resolvable:$true] %s1940
          %s1942 = sshll.u32 %s1939, 4
          %s1943 = int_to_ptr.hbm [resolvable:$true] %s1942
          %1948 = dma.vmem_to_hbm [thread:$0]  %s1941, 256, %s1943, %s1928, 64, 64, 4
        $region52: #{tpu_custom_call.1} parent=35 // pred_fallthru
          _
      $region36: #{tpu_custom_call.1} parent=5 // pred_fallthru
        _
      %p1949 = scmp.le.s32.totalorder 2, %s17
      // Predicated region
      $region53: #{tpu_custom_call.1} parent=5 // pred_check
        %p1950 = pneg %p1949
      $region54: #{tpu_custom_call.1} parent=5 // pred_check_branch
        %1952 = sbr.rel (%p1950) target = $region56
      $region55: #{tpu_custom_call.1} parent=5 // pred_region
        %s1953 = ssub.s32 %s17, 2
        // Predicated region
        $region57: #{tpu_custom_call.1} parent=55 // pred_check
          %p1954 = pneg %p135
        $region58: #{tpu_custom_call.1} parent=55 // pred_check_branch
          %1956 = sbr.rel (%p1954) target = $region60
        $region59: #{tpu_custom_call.1} parent=55 // pred_region
          %s1957 = sand.u32 %s120, 1
          %s1958 = scalar_lea.sflag [#allocation5], %s1957
          %s1959 = sand.u32 %s120, 1
          %s1960 = smul.addr %s1959, 16
          %s1961 = scalar_lea.vmem [#allocation9], %s1960
          %1963 = dma.done %s1958, 256
        $region60: #{tpu_custom_call.1} parent=55 // pred_fallthru
          _
      $region56: #{tpu_custom_call.1} parent=5 // pred_fallthru
        _
    $region6: #{tpu_custom_call.1} parent=1 // loop_footer
      %s21 = sadd.s32 1, %s17
    $region7: #{tpu_custom_call.1} parent=1 // loop_footer_branch
      %16 = sbr.rel target = $region3
    $region8: #{tpu_custom_call.1} parent=1 // loop_exit
      _
    %1964 = vsyncpa [#allocation4], 1
    %s1965 = scalar_lea.sflag [#allocation4], 1
    %1966 = vsyncpa %s1965, 1
    %1967 = vsyncpa [#allocation7], 1
    %1968 = vsyncpa [#allocation5], 1
    %s1969 = scalar_lea.sflag [#allocation5], 1
    %1970 = vsyncpa %s1969, 1

</llo_original>
